<compile_context>
chip_gen: v7x
topology: tpu7x:2x2x1
jax: 0.10.0
libtpu: 0.0.40
codegen_flags: <defaults>
</compile_context>

<pallas_src>
import math
import jax
import jax.numpy as jnp
from jax import lax
from jax.experimental import pallas as pl
from jax.experimental.pallas import tpu as pltpu


# ----------------------------- Fused Pallas kernel -------------------------

def fused_group_mlp_pool(feat, neg, layers1, layers2, out_pad):
    """Fused conv1-bank -> masked max-pool -> conv2-bank.

    feat : (R*K, C0) bf16   neighbour features, rows grouped per centroid.
    neg  : (R, K)    f32    0.0 for valid neighbour slots, -inf for padded (-1).
    layers*: list of (w_bf16 (cin,cout), scale_f32 (1,cout), shift_f32 (1,cout)),
             conv bias already folded into shift.
    Returns (R, out_pad) f32 (extra padded channels are zero).
    """
    R, K = neg.shape
    C0 = feat.shape[1]
    n1, n2 = len(layers1), len(layers2)
    assert n1 >= 1

    # Row-tile selection: big tiles when there is enough work, otherwise one
    # (8-aligned) block.  Tail rows are zero-padded and treated as "all valid"
    # so they stay finite; they are sliced off below.
    if R >= 512:
        tile = 512
        r_pad = pl.cdiv(R, tile) * tile
    else:
        tile = ((R + 7) // 8) * 8
        r_pad = tile
    if r_pad != R:
        feat = jnp.pad(feat, ((0, (r_pad - R) * K), (0, 0)))
        neg = jnp.pad(neg, ((0, r_pad - R), (0, 0)))        # pad rows: "valid"

    params = [p for layer in (layers1 + layers2) for p in layer]

    def kernel(*refs):
        feat_ref, neg_ref = refs[0], refs[1]
        o_ref = refs[-1]
        prefs = refs[2:-1]

        # --- conv1 bank over all tile*K neighbour points (stays in VMEM) ---
        h = feat_ref[...]                                    # (tile*K, C0) bf16
        for l in range(n1):
            w = prefs[3 * l][...]
            sc = prefs[3 * l + 1][...]
            sh = prefs[3 * l + 2][...]
            y = jnp.dot(h, w, preferred_element_type=jnp.float32)   # MXU, f32 acc
            y = jnp.maximum(y * sc + sh, 0.0)                # folded BN + ReLU (f32)
            h = y.astype(jnp.bfloat16) if l + 1 < n1 else y  # keep last in f32

        # --- masked max-pool over the K neighbours (torch: x[mask]=-inf; max) ---
        c1 = h.shape[-1]
        masked = h.reshape(tile, K, c1) + neg_ref[...][:, :, None]
        g = jnp.max(masked, axis=1)                          # (tile, c1) f32
        # NOTE: every centroid is its own neighbour (d^2=0 <= r^2), so at least
        # one slot is always valid and g is finite for real rows.

        # --- conv2 bank on pooled features ---
        out = g
        gq = g.astype(jnp.bfloat16)
        for l in range(n2):
            base = 3 * (n1 + l)
            w = prefs[base][...]
            sc = prefs[base + 1][...]
            sh = prefs[base + 2][...]
            y = jnp.dot(gq, w, preferred_element_type=jnp.float32)
            y = jnp.maximum(y * sc + sh, 0.0)
            out = y
            gq = y.astype(jnp.bfloat16)

        o_ref[...] = out                                     # lane-dense (>=128) store

    in_specs = [
        pl.BlockSpec((tile * K, C0), lambda i: (i, 0)),
        pl.BlockSpec((tile, K), lambda i: (i, 0)),
    ] + [pl.BlockSpec(p.shape, lambda i: (0, 0)) for p in params]

    out = pl.pallas_call(
        kernel,
        out_shape=jax.ShapeDtypeStruct((r_pad, out_pad), jnp.float32),
        grid=(r_pad // tile,),
        in_specs=in_specs,
        out_specs=pl.BlockSpec((tile, out_pad), lambda i: (i, 0)),
        compiler_params=pltpu.CompilerParams(
            dimension_semantics=("parallel",),
            vmem_limit_bytes=32 * 1024 * 1024,
        ),
    )(feat, neg, *params)
    return out[:R]


# ----------------------------- JAX glue (sampling / grouping) --------------
# TODO(synk): the data-dependent FPS loop and ball-query gather stay in plain
# JAX; an in-kernel scalar-prefetch gather of neighbour rows would avoid
# materializing the (B,S,K,C) grouped tensor in HBM.

def farthest_point_sampling(x, n_samples):
    """x: (B, N, 3) -> (B, n_samples) int32 indices (deterministic start at 0)."""
    B, N, _ = x.shape

    def body(i, state):
        idxs, dists, farthest = state
        idxs = idxs.at[:, i].set(farthest)
        centroid = x[jnp.arange(B), farthest][:, None, :]          # (B, 1, 3)
        d = jnp.sum((x - centroid) ** 2, axis=-1)                  # (B, N)
        dists = jnp.minimum(dists, d)
        farthest = jnp.argmax(dists, axis=-1).astype(jnp.int32)
        return idxs, dists, farthest

    init = (jnp.zeros((B, n_samples), jnp.int32),
            jnp.full((B, N), 1e10, jnp.float32),
            jnp.zeros((B,), jnp.int32))
    idxs, _, _ = lax.fori_loop(0, n_samples, body, init)
    return idxs


def ball_query(x, centroids, radius, K):
    """(B, S, K) int32 neighbour indices (first K inside radius, ascending),
    padded with -1.  Uses top_k instead of a full O(N log N) sort."""
    B, N, _ = x.shape
    d2 = jnp.sum((centroids[:, :, None, :] - x[:, None, :, :]) ** 2, axis=-1)  # (B,S,N)
    inside = d2 <= radius * radius
    arange = jnp.broadcast_to(jnp.arange(N, dtype=jnp.int32), d2.shape)
    cand = jnp.where(inside, arange, N)
    neg_topk, _ = lax.top_k(-cand, K)          # K smallest candidate indices
    sel = -neg_topk                            # ascending
    return jnp.where(sel == N, -1, sel).astype(jnp.int32)


def gather_points(vals, idx):
    """vals: (B, N, C), idx: (B, S, K) (-1 allowed, clamped; masked later) -> (B,S,K,C)."""
    B = vals.shape[0]
    safe = jnp.maximum(idx, 0)
    return vals[jnp.arange(B)[:, None, None], safe]


# ----------------------------- Module ---------------------------------------

class PointNetSetAbstractionPallas:
    """PointNetSetAbstraction forward: FPS + ball-query grouping in JAX glue;
    conv1 bank + masked max-pool + conv2 bank fused into one Pallas TPU kernel.
    BatchNorm is evaluated in inference mode: fixed, deterministically-initialized
    running stats (and the conv bias) folded into per-channel scale/shift."""

    def __init__(self, batch_size, nb_subsampled_points, nb_neighbours,
                 sampling_method, patch_radius, in_channel_x_complete,
                 in_channel_x, list_dim_channels1, pooling_operation, use_x,
                 list_dim_channels2, *, seed=42):
        assert len(patch_radius) == 1 and patch_radius[0] is not None
        assert pooling_operation[0] == "max"
        # TODO(synk): 'avg' / 'weighted_avg' / 'max_and_avg' pooling and the
        # patch_radius=None (group-all) branch are not implemented here.
        self.S = nb_subsampled_points
        self.K = nb_neighbours[0]
        self.radius = patch_radius[0]
        self.use_x = use_x[0]
        cin = in_channel_x_complete + (in_channel_x if self.use_x else 0)

        assert len(list_dim_channels1[0]) >= 1
        key = jax.random.PRNGKey(seed)
        self.layers1, c1, key = self._make_bank(key, cin, list_dim_channels1[0])
        self.layers2, c2, key = self._make_bank(key, c1, list_dim_channels2[0])
        self.last_channel = c2 if list_dim_channels2[0] else c1

        # Pad the final layer's cout up to a multiple of 128 -> lane-dense store.
        if self.layers2:
            self.layers2, self.out_pad = self._pad_last(self.layers2)
        else:
            self.layers1, self.out_pad = self._pad_last(self.layers1)

    @staticmethod
    def _make_bank(key, cin, dims):
        layers = []
        eps = 1e-5
        for cout in dims:
            key, kw, kb = jax.random.split(key, 3)
            bound = 1.0 / math.sqrt(cin)
            w = jax.random.uniform(kw, (cin, cout), jnp.float32, -bound, bound)
            b = jax.random.uniform(kb, (cout,), jnp.float32, -bound, bound)
            gamma = 1.0 + 0.01 * jnp.arange(cout, dtype=jnp.float32)
            beta = 0.01 * jnp.arange(cout, dtype=jnp.float32)
            r_mean = 0.02 * jnp.arange(cout, dtype=jnp.float32)
            r_var = jnp.ones((cout,), jnp.float32)
            scale = gamma / jnp.sqrt(r_var + eps)
            shift = beta - r_mean * scale
            shift = b * scale + shift                      # fold conv bias into shift
            layers.append((w.astype(jnp.bfloat16),
                           scale.reshape(1, cout),
                           shift.reshape(1, cout)))
            cin = cout
        return layers, cin, key

    @staticmethod
    def _pad_last(layers):
        w, sc, sh = layers[-1]
        cout = w.shape[1]
        cpad = ((cout + 127) // 128) * 128
        if cpad != cout:
            pad = cpad - cout
            w = jnp.pad(w, ((0, 0), (0, pad)))
            sc = jnp.pad(sc, ((0, 0), (0, pad)))
            sh = jnp.pad(sh, ((0, 0), (0, pad)))
            layers = layers[:-1] + [(w, sc, sh)]
        return layers, cpad

    def __call__(self, x, x_complete):
        B, N, _ = x.shape
        # --- sampling + grouping (glue) ---
        idx_ds = farthest_point_sampling(x, self.S)                       # (B, S)
        centroids = x[jnp.arange(B)[:, None], idx_ds]                     # (B, S, 3)
        idx = ball_query(x, centroids, self.radius, self.K)               # (B, S, K)
        grouped_xyz = gather_points(x, idx) - centroids[:, :, None, :]    # (B,S,K,3)
        grouped_feat = gather_points(x_complete, idx)                     # (B,S,K,Cf)
        if self.use_x:
            feat = jnp.concatenate([grouped_feat, grouped_xyz], axis=3)   # cat(feat, x_)
        else:
            feat = grouped_feat
        c0 = feat.shape[-1]

        R = B * self.S
        feat2d = feat.reshape(R * self.K, c0).astype(jnp.bfloat16)        # bf16 storage
        neg = jnp.where(idx.reshape(R, self.K) == -1,
                        -jnp.inf, 0.0).astype(jnp.float32)

        # --- fused conv1 bank + masked max-pool + conv2 bank (Pallas) ---
        out = fused_group_mlp_pool(feat2d, neg, self.layers1, self.layers2,
                                   self.out_pad)                          # (R, out_pad)
        out = out[:, :self.last_channel].reshape(B, self.S, self.last_channel)
        return centroids, out


# ----------------------------- Demo ------------------------------------------

if __name__ == "__main__":
    B, N = 2, 64          # batch, input points
    S, K = 16, 8          # subsampled centroids, neighbours per centroid
    C_FEAT = 4            # in_channel_x_complete (feature channels)

    module = PointNetSetAbstractionPallas(
        batch_size=B,
        nb_subsampled_points=S,
        nb_neighbours=[K],
        sampling_method=["fps"],
        patch_radius=[0.4],
        in_channel_x_complete=C_FEAT,
        in_channel_x=3,
        list_dim_channels1=[[16, 32]],
        pooling_operation=["max"],
        use_x=[True],
        list_dim_channels2=[[32]],
    )

    key = jax.random.PRNGKey(0)
    kx, kf = jax.random.split(key)
    x = jax.random.uniform(kx, (B, N, 3), jnp.float32)           # point coords in [0,1]^3
    x_complete = jax.random.normal(kf, (B, N, C_FEAT), jnp.float32)

    fwd = jax.jit(module.__call__)
    centroids, out = fwd(x, x_complete)
    jax.block_until_ready((centroids, out))

    assert centroids.shape == (B, S, 3)
    assert out.shape == (B, S, module.last_channel)
    assert bool(jnp.all(jnp.isfinite(out)))
    print("KERNEL_OK")
</pallas_src>

<mosaic_0001>
module attributes {stable_mosaic.version = 11 : i64} {
  func.func @kernel(%arg0: i32, %arg1: memref<256x7xbf16, #tpu.memory_space<vmem>>, %arg2: memref<32x8xf32, #tpu.memory_space<vmem>>, %arg3: memref<7x16xbf16, #tpu.memory_space<vmem>>, %arg4: memref<1x16xf32, #tpu.memory_space<vmem>>, %arg5: memref<1x16xf32, #tpu.memory_space<vmem>>, %arg6: memref<16x32xbf16, #tpu.memory_space<vmem>>, %arg7: memref<1x32xf32, #tpu.memory_space<vmem>>, %arg8: memref<1x32xf32, #tpu.memory_space<vmem>>, %arg9: memref<32x128xbf16, #tpu.memory_space<vmem>>, %arg10: memref<1x128xf32, #tpu.memory_space<vmem>>, %arg11: memref<1x128xf32, #tpu.memory_space<vmem>>, %arg12: memref<32x128xf32, #tpu.memory_space<vmem>>) attributes {dimension_semantics = [#tpu.dimension_semantics<parallel>], iteration_bounds = array<i64: 1>, scalar_prefetch = 0 : i64, scratch_operands = 0 : i64, tpu.core_type = #tpu.core_type<tc>, window_params = [{transform_indices = @transform_0, window_bounds = array<i64: 256, 7>}, {transform_indices = @transform_1, window_bounds = array<i64: 32, 8>}, {pipeline_mode = #tpu.pipeline_mode<synchronous>, transform_indices = @transform_2, window_bounds = array<i64: 7, 16>}, {pipeline_mode = #tpu.pipeline_mode<synchronous>, transform_indices = @transform_3, window_bounds = array<i64: 1, 16>}, {pipeline_mode = #tpu.pipeline_mode<synchronous>, transform_indices = @transform_4, window_bounds = array<i64: 1, 16>}, {pipeline_mode = #tpu.pipeline_mode<synchronous>, transform_indices = @transform_5, window_bounds = array<i64: 16, 32>}, {pipeline_mode = #tpu.pipeline_mode<synchronous>, transform_indices = @transform_6, window_bounds = array<i64: 1, 32>}, {pipeline_mode = #tpu.pipeline_mode<synchronous>, transform_indices = @transform_7, window_bounds = array<i64: 1, 32>}, {pipeline_mode = #tpu.pipeline_mode<synchronous>, transform_indices = @transform_8, window_bounds = array<i64: 32, 128>}, {pipeline_mode = #tpu.pipeline_mode<synchronous>, transform_indices = @transform_9, window_bounds = array<i64: 1, 128>}, {pipeline_mode = #tpu.pipeline_mode<synchronous>, transform_indices = @transform_10, window_bounds = array<i64: 1, 128>}, {transform_indices = @transform_11, window_bounds = array<i64: 32, 128>}]} {
    %c0 = arith.constant 0 : index
    %c0_0 = arith.constant 0 : index
    %0 = vector.load %arg1[%c0, %c0_0] : memref<256x7xbf16, #tpu.memory_space<vmem>>, vector<256x7xbf16>
    %c0_1 = arith.constant 0 : index
    %c0_2 = arith.constant 0 : index
    %1 = vector.load %arg3[%c0_1, %c0_2] : memref<7x16xbf16, #tpu.memory_space<vmem>>, vector<7x16xbf16>
    %c0_3 = arith.constant 0 : index
    %c0_4 = arith.constant 0 : index
    %2 = vector.load %arg4[%c0_3, %c0_4] : memref<1x16xf32, #tpu.memory_space<vmem>>, vector<1x16xf32>
    %c0_5 = arith.constant 0 : index
    %c0_6 = arith.constant 0 : index
    %3 = vector.load %arg5[%c0_5, %c0_6] : memref<1x16xf32, #tpu.memory_space<vmem>>, vector<1x16xf32>
    %cst = arith.constant dense<0.000000e+00> : vector<256x16xf32>
    %4 = tpu.matmul %0, %1, %cst {dimension_numbers = #tpu.dot_dimension_numbers<[1], [0], [0], [1], [0, 0, 1, 1], [], []>} : vector<256x7xbf16>, vector<7x16xbf16>, vector<256x16xf32> -> vector<256x16xf32>
    %5 = vector.broadcast %2 : vector<1x16xf32> to vector<256x16xf32>
    %6 = arith.mulf %4, %5 : vector<256x16xf32>
    %7 = vector.broadcast %3 : vector<1x16xf32> to vector<256x16xf32>
    %8 = arith.addf %6, %7 : vector<256x16xf32>
    %cst_7 = arith.constant 0.000000e+00 : f32
    %9 = vector.broadcast %cst_7 : f32 to vector<256x16xf32>
    %10 = arith.maximumf %8, %9 : vector<256x16xf32>
    %11 = arith.truncf %10 : vector<256x16xf32> to vector<256x16xbf16>
    %c0_8 = arith.constant 0 : index
    %c0_9 = arith.constant 0 : index
    %12 = vector.load %arg6[%c0_8, %c0_9] : memref<16x32xbf16, #tpu.memory_space<vmem>>, vector<16x32xbf16>
    %c0_10 = arith.constant 0 : index
    %c0_11 = arith.constant 0 : index
    %13 = vector.load %arg7[%c0_10, %c0_11] : memref<1x32xf32, #tpu.memory_space<vmem>>, vector<1x32xf32>
    %c0_12 = arith.constant 0 : index
    %c0_13 = arith.constant 0 : index
    %14 = vector.load %arg8[%c0_12, %c0_13] : memref<1x32xf32, #tpu.memory_space<vmem>>, vector<1x32xf32>
    %cst_14 = arith.constant dense<0.000000e+00> : vector<256x32xf32>
    %15 = tpu.matmul %11, %12, %cst_14 {dimension_numbers = #tpu.dot_dimension_numbers<[1], [0], [0], [1], [0, 0, 1, 1], [], []>} : vector<256x16xbf16>, vector<16x32xbf16>, vector<256x32xf32> -> vector<256x32xf32>
    %16 = vector.broadcast %13 : vector<1x32xf32> to vector<256x32xf32>
    %17 = arith.mulf %15, %16 : vector<256x32xf32>
    %18 = vector.broadcast %14 : vector<1x32xf32> to vector<256x32xf32>
    %19 = arith.addf %17, %18 : vector<256x32xf32>
    %cst_15 = arith.constant 0.000000e+00 : f32
    %20 = vector.broadcast %cst_15 : f32 to vector<256x32xf32>
    %21 = arith.maximumf %19, %20 : vector<256x32xf32>
    %22 = vector.shape_cast %21 : vector<256x32xf32> to vector<32x8x32xf32>
    %c0_16 = arith.constant 0 : index
    %c0_17 = arith.constant 0 : index
    %23 = vector.load %arg2[%c0_16, %c0_17] : memref<32x8xf32, #tpu.memory_space<vmem>>, vector<32x8xf32>
    %24 = vector.shape_cast %23 : vector<32x8xf32> to vector<32x8x1xf32>
    %25 = vector.broadcast %24 : vector<32x8x1xf32> to vector<32x8x32xf32>
    %26 = arith.addf %22, %25 : vector<32x8x32xf32>
    %cst_18 = arith.constant dense<0xFF800000> : vector<32x32xf32>
    %27 = vector.multi_reduction <maximumf>, %26, %cst_18 [1] : vector<32x8x32xf32> to vector<32x32xf32>
    %28 = arith.truncf %27 : vector<32x32xf32> to vector<32x32xbf16>
    %c0_19 = arith.constant 0 : index
    %c0_20 = arith.constant 0 : index
    %29 = vector.load %arg9[%c0_19, %c0_20] : memref<32x128xbf16, #tpu.memory_space<vmem>>, vector<32x128xbf16>
    %c0_21 = arith.constant 0 : index
    %c0_22 = arith.constant 0 : index
    %30 = vector.load %arg10[%c0_21, %c0_22] : memref<1x128xf32, #tpu.memory_space<vmem>>, vector<1x128xf32>
    %c0_23 = arith.constant 0 : index
    %c0_24 = arith.constant 0 : index
    %31 = vector.load %arg11[%c0_23, %c0_24] : memref<1x128xf32, #tpu.memory_space<vmem>>, vector<1x128xf32>
    %cst_25 = arith.constant dense<0.000000e+00> : vector<32x128xf32>
    %32 = tpu.matmul %28, %29, %cst_25 {dimension_numbers = #tpu.dot_dimension_numbers<[1], [0], [0], [1], [0, 0, 1, 1], [], []>} : vector<32x32xbf16>, vector<32x128xbf16>, vector<32x128xf32> -> vector<32x128xf32>
    %33 = vector.broadcast %30 : vector<1x128xf32> to vector<32x128xf32>
    %34 = arith.mulf %32, %33 : vector<32x128xf32>
    %35 = vector.broadcast %31 : vector<1x128xf32> to vector<32x128xf32>
    %36 = arith.addf %34, %35 : vector<32x128xf32>
    %cst_26 = arith.constant 0.000000e+00 : f32
    %37 = vector.broadcast %cst_26 : f32 to vector<32x128xf32>
    %38 = arith.maximumf %36, %37 : vector<32x128xf32>
    %c0_27 = arith.constant 0 : index
    %c0_28 = arith.constant 0 : index
    %39 = vector.load %arg12[%c0_27, %c0_28] : memref<32x128xf32, #tpu.memory_space<vmem>>, vector<32x128xf32>
    tpu.vector_store %arg12[%c0_27, %c0_28], %38 {strides = array<i32>} : memref<32x128xf32, #tpu.memory_space<vmem>>, vector<32x128xf32>,
    return
  }
  func.func @transform_0(%arg0: i32) -> (i32, i32) {
    %c0_i32 = arith.constant 0 : i32
    %c0_i32_0 = arith.constant 0 : i32
    return %arg0, %c0_i32 : i32, i32
  }
  func.func @transform_1(%arg0: i32) -> (i32, i32) {
    %c0_i32 = arith.constant 0 : i32
    %c0_i32_0 = arith.constant 0 : i32
    return %arg0, %c0_i32 : i32, i32
  }
  func.func @transform_2(%arg0: i32) -> (i32, i32) {
    %c0_i32 = arith.constant 0 : i32
    %c0_i32_0 = arith.constant 0 : i32
    %c0_i32_1 = arith.constant 0 : i32
    return %c0_i32, %c0_i32_0 : i32, i32
  }
  func.func @transform_3(%arg0: i32) -> (i32, i32) {
    %c0_i32 = arith.constant 0 : i32
    %c0_i32_0 = arith.constant 0 : i32
    %c0_i32_1 = arith.constant 0 : i32
    return %c0_i32, %c0_i32_0 : i32, i32
  }
  func.func @transform_4(%arg0: i32) -> (i32, i32) {
    %c0_i32 = arith.constant 0 : i32
    %c0_i32_0 = arith.constant 0 : i32
    %c0_i32_1 = arith.constant 0 : i32
    return %c0_i32, %c0_i32_0 : i32, i32
  }
  func.func @transform_5(%arg0: i32) -> (i32, i32) {
    %c0_i32 = arith.constant 0 : i32
    %c0_i32_0 = arith.constant 0 : i32
    %c0_i32_1 = arith.constant 0 : i32
    return %c0_i32, %c0_i32_0 : i32, i32
  }
  func.func @transform_6(%arg0: i32) -> (i32, i32) {
    %c0_i32 = arith.constant 0 : i32
    %c0_i32_0 = arith.constant 0 : i32
    %c0_i32_1 = arith.constant 0 : i32
    return %c0_i32, %c0_i32_0 : i32, i32
  }
  func.func @transform_7(%arg0: i32) -> (i32, i32) {
    %c0_i32 = arith.constant 0 : i32
    %c0_i32_0 = arith.constant 0 : i32
    %c0_i32_1 = arith.constant 0 : i32
    return %c0_i32, %c0_i32_0 : i32, i32
  }
  func.func @transform_8(%arg0: i32) -> (i32, i32) {
    %c0_i32 = arith.constant 0 : i32
    %c0_i32_0 = arith.constant 0 : i32
    %c0_i32_1 = arith.constant 0 : i32
    return %c0_i32, %c0_i32_0 : i32, i32
  }
  func.func @transform_9(%arg0: i32) -> (i32, i32) {
    %c0_i32 = arith.constant 0 : i32
    %c0_i32_0 = arith.constant 0 : i32
    %c0_i32_1 = arith.constant 0 : i32
    return %c0_i32, %c0_i32_0 : i32, i32
  }
  func.func @transform_10(%arg0: i32) -> (i32, i32) {
    %c0_i32 = arith.constant 0 : i32
    %c0_i32_0 = arith.constant 0 : i32
    %c0_i32_1 = arith.constant 0 : i32
    return %c0_i32, %c0_i32_0 : i32, i32
  }
  func.func @transform_11(%arg0: i32) -> (i32, i32) {
    %c0_i32 = arith.constant 0 : i32
    %c0_i32_0 = arith.constant 0 : i32
    return %arg0, %c0_i32 : i32, i32
  }
}

</mosaic_0001>

<llo_original>
// kernel: custom-call.8
$region0: #{custom-call.8}
  %s0 = inlined_call_operand.vmem [shape: f32[2,64], index: 0, kind: output, shape index: {}]

// kernel: a_call__.1
$region0: #{a_call__.1}
  #allocation0 [shape = 'u32[]', space=smem, size = 0x4, offset = 0x4, fixed_abs, tag = 'smem constant byte address 0x4 - core index']
  #allocation1 [shape = 'u32[144,128]{1,0:T(1,128)}', space=vmem, size = 0x12000, scoped, tag = 'internal scratch']
  %s0 = inlined_call_operand.vmem [shape: bf16[256,7], index: 0, kind: input, shape index: {}]
  %s1 = inlined_call_operand.vmem [shape: f32[32,8], index: 1, kind: input, shape index: {}]
  %s2 = inlined_call_operand.vmem [shape: bf16[7,16], index: 2, kind: input, shape index: {}]
  %s3 = inlined_call_operand.vmem [shape: f32[1,16], index: 3, kind: input, shape index: {}]
  %s4 = inlined_call_operand.vmem [shape: f32[1,16], index: 4, kind: input, shape index: {}]
  %s5 = inlined_call_operand.vmem [shape: bf16[16,32], index: 5, kind: input, shape index: {}]
  %s6 = inlined_call_operand.vmem [shape: f32[1,32], index: 6, kind: input, shape index: {}]
  %s7 = inlined_call_operand.vmem [shape: f32[1,32], index: 7, kind: input, shape index: {}]
  %s8 = inlined_call_operand.vmem [shape: bf16[32,128], index: 8, kind: input, shape index: {}]
  %s9 = inlined_call_operand.vmem [shape: f32[1,128], index: 9, kind: input, shape index: {}]
  %s10 = inlined_call_operand.vmem [shape: f32[1,128], index: 10, kind: input, shape index: {}]
  %s11 = inlined_call_operand.hbm [shape: f32[32,128], index: 11, kind: output, shape index: {}]
  %s12 = sld [smem:[#allocation0]]
  $region54: #{a_call__.1} parent=0
    _
  %s14 = ssub.s32 1, %s12
  %s15 = scalar_select 0, %s14, %s12
  $region1: #{a_call__.1} parent=0
    #allocation2 [shape = 'u8[16384]{0}', space=vmem, size = 0x4000, scoped, tag = 'output window, operand 0, single buffered']
    #allocation3 [shape = 's32[1]{0}', space=sflag, size = 0x4, scoped, tag = 'scoped memory for a_call__.1']
    %16 = vsyncpa [#allocation3], 0
    // Predicated region
    $region2: #{a_call__.1} parent=1 // pred_check
      _
    $region3: #{a_call__.1} parent=1 // pred_check_branch
      %18 = sbr.rel (0) target = $region5
    $region4: #{a_call__.1} parent=1 // pred_region
      _
    $region5: #{a_call__.1} parent=1 // pred_fallthru
      _
    // Predicated region
    $region6: #{a_call__.1} parent=1 // pred_check
      _
    $region7: #{a_call__.1} parent=1 // pred_check_branch
      %20 = sbr.rel (0) target = $region9
    $region8: #{a_call__.1} parent=1 // pred_region
      _
    $region9: #{a_call__.1} parent=1 // pred_fallthru
      _
    // Predicated region
    $region10: #{a_call__.1} parent=1 // pred_check
      _
    $region11: #{a_call__.1} parent=1 // pred_check_branch
      %22 = sbr.rel (0) target = $region13
    $region12: #{a_call__.1} parent=1 // pred_region
      _
    $region13: #{a_call__.1} parent=1 // pred_fallthru
      _
    // Predicated region
    $region14: #{a_call__.1} parent=1 // pred_check
      _
    $region15: #{a_call__.1} parent=1 // pred_check_branch
      %24 = sbr.rel (0) target = $region17
    $region16: #{a_call__.1} parent=1 // pred_region
      _
    $region17: #{a_call__.1} parent=1 // pred_fallthru
      _
    // Predicated region
    $region18: #{a_call__.1} parent=1 // pred_check
      _
    $region19: #{a_call__.1} parent=1 // pred_check_branch
      %26 = sbr.rel (0) target = $region21
    $region20: #{a_call__.1} parent=1 // pred_region
      _
    $region21: #{a_call__.1} parent=1 // pred_fallthru
      _
    // Predicated region
    $region22: #{a_call__.1} parent=1 // pred_check
      _
    $region23: #{a_call__.1} parent=1 // pred_check_branch
      %28 = sbr.rel (0) target = $region25
    $region24: #{a_call__.1} parent=1 // pred_region
      _
    $region25: #{a_call__.1} parent=1 // pred_fallthru
      _
    // Predicated region
    $region26: #{a_call__.1} parent=1 // pred_check
      _
    $region27: #{a_call__.1} parent=1 // pred_check_branch
      %30 = sbr.rel (0) target = $region29
    $region28: #{a_call__.1} parent=1 // pred_region
      _
    $region29: #{a_call__.1} parent=1 // pred_fallthru
      _
    // Predicated region
    $region30: #{a_call__.1} parent=1 // pred_check
      _
    $region31: #{a_call__.1} parent=1 // pred_check_branch
      %32 = sbr.rel (0) target = $region33
    $region32: #{a_call__.1} parent=1 // pred_region
      _
    $region33: #{a_call__.1} parent=1 // pred_fallthru
      _
    // Predicated region
    $region34: #{a_call__.1} parent=1 // pred_check
      _
    $region35: #{a_call__.1} parent=1 // pred_check_branch
      %34 = sbr.rel (0) target = $region37
    $region36: #{a_call__.1} parent=1 // pred_region
      _
    $region37: #{a_call__.1} parent=1 // pred_fallthru
      _
    // Predicated region
    $region38: #{a_call__.1} parent=1 // pred_check
      _
    $region39: #{a_call__.1} parent=1 // pred_check_branch
      %36 = sbr.rel (0) target = $region41
    $region40: #{a_call__.1} parent=1 // pred_region
      _
    $region41: #{a_call__.1} parent=1 // pred_fallthru
      _
    // Predicated region
    $region42: #{a_call__.1} parent=1 // pred_check
      _
    $region43: #{a_call__.1} parent=1 // pred_check_branch
      %38 = sbr.rel (0) target = $region45
    $region44: #{a_call__.1} parent=1 // pred_region
      _
    $region45: #{a_call__.1} parent=1 // pred_fallthru
      _
    %v40 = vld [vmem:[%s0] sm:$0xf]
    %v41 = vld [vmem:[%s0 + $0x4] sm:$0xf]
    %v42 = vld [vmem:[%s0 + $0x8] sm:$0xf]
    %v43 = vld [vmem:[%s0 + $0xc] sm:$0xf]
    %v44 = vld [vmem:[%s0 + $0x10] sm:$0xf]
    %v45 = vld [vmem:[%s0 + $0x14] sm:$0xf]
    %v46 = vld [vmem:[%s0 + $0x18] sm:$0xf]
    %v47 = vld [vmem:[%s0 + $0x1c] sm:$0xf]
    %v48 = vld [vmem:[%s0 + $0x20] sm:$0xf]
    %v49 = vld [vmem:[%s0 + $0x24] sm:$0xf]
    %v50 = vld [vmem:[%s0 + $0x28] sm:$0xf]
    %v51 = vld [vmem:[%s0 + $0x2c] sm:$0xf]
    %v52 = vld [vmem:[%s0 + $0x30] sm:$0xf]
    %v53 = vld [vmem:[%s0 + $0x34] sm:$0xf]
    %v54 = vld [vmem:[%s0 + $0x38] sm:$0xf]
    %v55 = vld [vmem:[%s0 + $0x3c] sm:$0xf]
    %v56 = vld [vmem:[%s0 + $0x40] sm:$0xf]
    %v57 = vld [vmem:[%s0 + $0x44] sm:$0xf]
    %v58 = vld [vmem:[%s0 + $0x48] sm:$0xf]
    %v59 = vld [vmem:[%s0 + $0x4c] sm:$0xf]
    %v60 = vld [vmem:[%s0 + $0x50] sm:$0xf]
    %v61 = vld [vmem:[%s0 + $0x54] sm:$0xf]
    %v62 = vld [vmem:[%s0 + $0x58] sm:$0xf]
    %v63 = vld [vmem:[%s0 + $0x5c] sm:$0xf]
    %v64 = vld [vmem:[%s0 + $0x60] sm:$0xf]
    %v65 = vld [vmem:[%s0 + $0x64] sm:$0xf]
    %v66 = vld [vmem:[%s0 + $0x68] sm:$0xf]
    %v67 = vld [vmem:[%s0 + $0x6c] sm:$0xf]
    %v68 = vld [vmem:[%s0 + $0x70] sm:$0xf]
    %v69 = vld [vmem:[%s0 + $0x74] sm:$0xf]
    %v70 = vld [vmem:[%s0 + $0x78] sm:$0xf]
    %v71 = vld [vmem:[%s0 + $0x7c] sm:$0xf]
    %v72 = vld [vmem:[%s2] sm:$0xf]
    %v73 = vld [vmem:[%s3] sm:$0x1]
    %v74 = vld [vmem:[%s4] sm:$0x1]
    %v107 = vunpack.c.l.b16 %v40
    %v108 = vunpack.c.l.b16 %v41
    %v109 = vunpack.c.l.b16 %v42
    %v110 = vunpack.c.l.b16 %v43
    %v111 = vunpack.c.l.b16 %v44
    %v112 = vunpack.c.l.b16 %v45
    %v113 = vunpack.c.l.b16 %v46
    %v114 = vunpack.c.l.b16 %v47
    %v115 = vunpack.c.l.b16 %v48
    %v116 = vunpack.c.l.b16 %v49
    %v117 = vunpack.c.l.b16 %v50
    %v118 = vunpack.c.l.b16 %v51
    %v119 = vunpack.c.l.b16 %v52
    %v120 = vunpack.c.l.b16 %v53
    %v121 = vunpack.c.l.b16 %v54
    %v122 = vunpack.c.l.b16 %v55
    %v123 = vunpack.c.l.b16 %v56
    %v124 = vunpack.c.l.b16 %v57
    %v125 = vunpack.c.l.b16 %v58
    %v126 = vunpack.c.l.b16 %v59
    %v127 = vunpack.c.l.b16 %v60
    %v128 = vunpack.c.l.b16 %v61
    %v129 = vunpack.c.l.b16 %v62
    %v130 = vunpack.c.l.b16 %v63
    %v131 = vunpack.c.l.b16 %v64
    %v132 = vunpack.c.l.b16 %v65
    %v133 = vunpack.c.l.b16 %v66
    %v134 = vunpack.c.l.b16 %v67
    %v135 = vunpack.c.l.b16 %v68
    %v136 = vunpack.c.l.b16 %v69
    %v137 = vunpack.c.l.b16 %v70
    %v138 = vunpack.c.l.b16 %v71
    %v139 = vpack.c.b16 %v108, %v107
    %v140 = vpack.c.b16 %v110, %v109
    %v141 = vpack.c.b16 %v112, %v111
    %v142 = vpack.c.b16 %v114, %v113
    %v143 = vpack.c.b16 %v116, %v115
    %v144 = vpack.c.b16 %v118, %v117
    %v145 = vpack.c.b16 %v120, %v119
    %v146 = vpack.c.b16 %v122, %v121
    %v147 = vpack.c.b16 %v124, %v123
    %v148 = vpack.c.b16 %v126, %v125
    %v149 = vpack.c.b16 %v128, %v127
    %v150 = vpack.c.b16 %v130, %v129
    %v151 = vpack.c.b16 %v132, %v131
    %v152 = vpack.c.b16 %v134, %v133
    %v153 = vpack.c.b16 %v136, %v135
    %v154 = vpack.c.b16 %v138, %v137
    %vm155 = vcmask 56320
    %v157 = vsel %vm155, %v139, 0
    %v160 = vsel %vm155, %v140, 0
    %v163 = vsel %vm155, %v141, 0
    %v166 = vsel %vm155, %v142, 0
    %v169 = vsel %vm155, %v143, 0
    %v172 = vsel %vm155, %v144, 0
    %v175 = vsel %vm155, %v145, 0
    %v178 = vsel %vm155, %v146, 0
    %v181 = vsel %vm155, %v147, 0
    %v184 = vsel %vm155, %v148, 0
    %v187 = vsel %vm155, %v149, 0
    %v190 = vsel %vm155, %v150, 0
    %v193 = vsel %vm155, %v151, 0
    %v196 = vsel %vm155, %v152, 0
    %v199 = vsel %vm155, %v153, 0
    %v202 = vsel %vm155, %v154, 0
    %vm204 = vcmask 1042432
    %vm205 = vcmask 1043456
    %v206 = vsel %vm204, 4294967295, 65535
    %v207 = vsel %vm205, %v206, 0
    %v209 = vand.u32 %v72, %v207
    %211 = vmatprep.subr.bf16.mxu0 0
    %212 = vmatpush1.bf16.msra.mxu0 %v209
    %213 = vmatprep.subr.bf16.mxu0 0
    %214 = vmatpush1.bf16.msra.mxu0 0
    %215 = vmatprep.subr.bf16.mxu0 0
    %216 = vmatpush1.bf16.msra.mxu0 0
    %217 = vmatprep.subr.bf16.mxu0 0
    %218 = vmatpush1.bf16.msra.mxu0 0
    %219 = vmatprep.subr.bf16.mxu0 0
    %220 = vmatpush1.bf16.msra.mxu0 0
    %221 = vmatprep.subr.bf16.mxu0 0
    %222 = vmatpush1.bf16.msra.mxu0 0
    %223 = vmatprep.subr.bf16.mxu0 0
    %224 = vmatpush1.bf16.msra.mxu0 0
    %225 = vmatprep.subr.bf16.mxu0 0
    %226 = vmatpush1.bf16.msra.mxu0 0
    %227 = vmatprep.subr.bf16.mxu0 0
    %228 = vmatpush1.bf16.msra.mxu0 0
    %229 = vmatprep.subr.bf16.mxu0 0
    %230 = vmatpush1.bf16.msra.mxu0 0
    %231 = vmatprep.subr.bf16.mxu0 0
    %232 = vmatpush1.bf16.msra.mxu0 0
    %233 = vmatprep.subr.bf16.mxu0 0
    %234 = vmatpush1.bf16.msra.mxu0 0
    %235 = vmatprep.subr.bf16.mxu0 0
    %236 = vmatpush1.bf16.msra.mxu0 0
    %237 = vmatprep.subr.bf16.mxu0 0
    %238 = vmatpush1.bf16.msra.mxu0 0
    %239 = vmatprep.subr.bf16.mxu0 0
    %240 = vmatpush1.bf16.msra.mxu0 0
    %241 = vmatprep.subr.bf16.mxu0 0
    %242 = vmatpush1.bf16.msra.mxu0 0
    %243 = vmatprep.mubr.bf16.mxu0 0
    %244 = vmatmul.mubr.bf16.gmra.mrb[0].mxu0 %v157
    %v245 = vpop.f32.mrb[0].mxu0
    %v246 = vadd.f32 0.0, %v245
    %v247 = vpop.f32.mrb[0].mxu0
    %v248 = vpop.f32.mrb[0].mxu0
    %v249 = vadd.f32 0.0, %v248
    %v250 = vpop.f32.mrb[0].mxu0
    %251 = vmatprep.mubr.bf16.mxu0 0
    %252 = vmatmul.mubr.bf16.gmra.mrb[0].mxu0 %v160
    %v253 = vpop.f32.mrb[0].mxu0
    %v254 = vadd.f32 0.0, %v253
    %v255 = vpop.f32.mrb[0].mxu0
    %v256 = vpop.f32.mrb[0].mxu0
    %v257 = vadd.f32 0.0, %v256
    %v258 = vpop.f32.mrb[0].mxu0
    %259 = vmatprep.mubr.bf16.mxu0 0
    %260 = vmatmul.mubr.bf16.gmra.mrb[0].mxu0 %v163
    %v261 = vpop.f32.mrb[0].mxu0
    %v262 = vadd.f32 0.0, %v261
    %v263 = vpop.f32.mrb[0].mxu0
    %v264 = vpop.f32.mrb[0].mxu0
    %v265 = vadd.f32 0.0, %v264
    %v266 = vpop.f32.mrb[0].mxu0
    %267 = vmatprep.mubr.bf16.mxu0 0
    %268 = vmatmul.mubr.bf16.gmra.mrb[0].mxu0 %v166
    %v269 = vpop.f32.mrb[0].mxu0
    %v270 = vadd.f32 0.0, %v269
    %v271 = vpop.f32.mrb[0].mxu0
    %v272 = vpop.f32.mrb[0].mxu0
    %v273 = vadd.f32 0.0, %v272
    %v274 = vpop.f32.mrb[0].mxu0
    %275 = vmatprep.mubr.bf16.mxu0 0
    %276 = vmatmul.mubr.bf16.gmra.mrb[0].mxu0 %v169
    %v277 = vpop.f32.mrb[0].mxu0
    %v278 = vadd.f32 0.0, %v277
    %v279 = vpop.f32.mrb[0].mxu0
    %v280 = vpop.f32.mrb[0].mxu0
    %v281 = vadd.f32 0.0, %v280
    %v282 = vpop.f32.mrb[0].mxu0
    %283 = vmatprep.mubr.bf16.mxu0 0
    %284 = vmatmul.mubr.bf16.gmra.mrb[0].mxu0 %v172
    %v285 = vpop.f32.mrb[0].mxu0
    %v286 = vadd.f32 0.0, %v285
    %v287 = vpop.f32.mrb[0].mxu0
    %v288 = vpop.f32.mrb[0].mxu0
    %v289 = vadd.f32 0.0, %v288
    %v290 = vpop.f32.mrb[0].mxu0
    %291 = vmatprep.mubr.bf16.mxu0 0
    %292 = vmatmul.mubr.bf16.gmra.mrb[0].mxu0 %v175
    %v293 = vpop.f32.mrb[0].mxu0
    %v294 = vadd.f32 0.0, %v293
    %v295 = vpop.f32.mrb[0].mxu0
    %v296 = vpop.f32.mrb[0].mxu0
    %v297 = vadd.f32 0.0, %v296
    %v298 = vpop.f32.mrb[0].mxu0
    %299 = vmatprep.mubr.bf16.mxu0 0
    %300 = vmatmul.mubr.bf16.gmra.mrb[0].mxu0 %v178
    %v301 = vpop.f32.mrb[0].mxu0
    %v302 = vadd.f32 0.0, %v301
    %v303 = vpop.f32.mrb[0].mxu0
    %v304 = vpop.f32.mrb[0].mxu0
    %v305 = vadd.f32 0.0, %v304
    %v306 = vpop.f32.mrb[0].mxu0
    %307 = vmatprep.mubr.bf16.mxu0 0
    %308 = vmatmul.mubr.bf16.gmra.mrb[0].mxu0 %v181
    %v309 = vpop.f32.mrb[0].mxu0
    %v310 = vadd.f32 0.0, %v309
    %v311 = vpop.f32.mrb[0].mxu0
    %v312 = vpop.f32.mrb[0].mxu0
    %v313 = vadd.f32 0.0, %v312
    %v314 = vpop.f32.mrb[0].mxu0
    %315 = vmatprep.mubr.bf16.mxu0 0
    %316 = vmatmul.mubr.bf16.gmra.mrb[0].mxu0 %v184
    %v317 = vpop.f32.mrb[0].mxu0
    %v318 = vadd.f32 0.0, %v317
    %v319 = vpop.f32.mrb[0].mxu0
    %v320 = vpop.f32.mrb[0].mxu0
    %v321 = vadd.f32 0.0, %v320
    %v322 = vpop.f32.mrb[0].mxu0
    %323 = vmatprep.mubr.bf16.mxu0 0
    %324 = vmatmul.mubr.bf16.gmra.mrb[0].mxu0 %v187
    %v325 = vpop.f32.mrb[0].mxu0
    %v326 = vadd.f32 0.0, %v325
    %v327 = vpop.f32.mrb[0].mxu0
    %v328 = vpop.f32.mrb[0].mxu0
    %v329 = vadd.f32 0.0, %v328
    %v330 = vpop.f32.mrb[0].mxu0
    %331 = vmatprep.mubr.bf16.mxu0 0
    %332 = vmatmul.mubr.bf16.gmra.mrb[0].mxu0 %v190
    %v333 = vpop.f32.mrb[0].mxu0
    %v334 = vadd.f32 0.0, %v333
    %v335 = vpop.f32.mrb[0].mxu0
    %v336 = vpop.f32.mrb[0].mxu0
    %v337 = vadd.f32 0.0, %v336
    %v338 = vpop.f32.mrb[0].mxu0
    %339 = vmatprep.mubr.bf16.mxu0 0
    %340 = vmatmul.mubr.bf16.gmra.mrb[0].mxu0 %v193
    %v341 = vpop.f32.mrb[0].mxu0
    %v342 = vadd.f32 0.0, %v341
    %v343 = vpop.f32.mrb[0].mxu0
    %v344 = vpop.f32.mrb[0].mxu0
    %v345 = vadd.f32 0.0, %v344
    %v346 = vpop.f32.mrb[0].mxu0
    %347 = vmatprep.mubr.bf16.mxu0 0
    %348 = vmatmul.mubr.bf16.gmra.mrb[0].mxu0 %v196
    %v349 = vpop.f32.mrb[0].mxu0
    %v350 = vadd.f32 0.0, %v349
    %v351 = vpop.f32.mrb[0].mxu0
    %v352 = vpop.f32.mrb[0].mxu0
    %v353 = vadd.f32 0.0, %v352
    %v354 = vpop.f32.mrb[0].mxu0
    %355 = vmatprep.mubr.bf16.mxu0 0
    %356 = vmatmul.mubr.bf16.gmra.mrb[0].mxu0 %v199
    %v357 = vpop.f32.mrb[0].mxu0
    %v358 = vadd.f32 0.0, %v357
    %v359 = vpop.f32.mrb[0].mxu0
    %v360 = vpop.f32.mrb[0].mxu0
    %v361 = vadd.f32 0.0, %v360
    %v362 = vpop.f32.mrb[0].mxu0
    %363 = vmatprep.mubr.bf16.mxu0 0
    %364 = vmatmul.mubr.bf16.gmra.mrb[0].mxu0 %v202
    %v365 = vpop.f32.mrb[0].mxu0
    %v366 = vadd.f32 0.0, %v365
    %v367 = vpop.f32.mrb[0].mxu0
    %v368 = vpop.f32.mrb[0].mxu0
    %v369 = vadd.f32 0.0, %v368
    %v370 = vpop.f32.mrb[0].mxu0
    %371 = vdwg.mxu0
    %v373 = vlaneseq
    %v374 = vshrl.u32 %v373, 7
    %v375 = vsub.s32 0, %v374
    %v376 = vrot.slane %v73, %v375
    %v378 = vmul.f32 %v246, %v376
    %v379 = vmul.f32 %v249, %v376
    %v380 = vmul.f32 %v254, %v376
    %v381 = vmul.f32 %v257, %v376
    %v382 = vmul.f32 %v262, %v376
    %v383 = vmul.f32 %v265, %v376
    %v384 = vmul.f32 %v270, %v376
    %v385 = vmul.f32 %v273, %v376
    %v386 = vmul.f32 %v278, %v376
    %v387 = vmul.f32 %v281, %v376
    %v388 = vmul.f32 %v286, %v376
    %v389 = vmul.f32 %v289, %v376
    %v390 = vmul.f32 %v294, %v376
    %v391 = vmul.f32 %v297, %v376
    %v392 = vmul.f32 %v302, %v376
    %v393 = vmul.f32 %v305, %v376
    %v394 = vmul.f32 %v310, %v376
    %v395 = vmul.f32 %v313, %v376
    %v396 = vmul.f32 %v318, %v376
    %v397 = vmul.f32 %v321, %v376
    %v398 = vmul.f32 %v326, %v376
    %v399 = vmul.f32 %v329, %v376
    %v400 = vmul.f32 %v334, %v376
    %v401 = vmul.f32 %v337, %v376
    %v402 = vmul.f32 %v342, %v376
    %v403 = vmul.f32 %v345, %v376
    %v404 = vmul.f32 %v350, %v376
    %v405 = vmul.f32 %v353, %v376
    %v406 = vmul.f32 %v358, %v376
    %v407 = vmul.f32 %v361, %v376
    %v408 = vmul.f32 %v366, %v376
    %v409 = vmul.f32 %v369, %v376
    %v411 = vlaneseq
    %v412 = vshrl.u32 %v411, 7
    %v413 = vsub.s32 0, %v412
    %v414 = vrot.slane %v74, %v413
    %v416 = vadd.f32 %v378, %v414
    %v417 = vadd.f32 %v379, %v414
    %v418 = vadd.f32 %v380, %v414
    %v419 = vadd.f32 %v381, %v414
    %v420 = vadd.f32 %v382, %v414
    %v421 = vadd.f32 %v383, %v414
    %v422 = vadd.f32 %v384, %v414
    %v423 = vadd.f32 %v385, %v414
    %v424 = vadd.f32 %v386, %v414
    %v425 = vadd.f32 %v387, %v414
    %v426 = vadd.f32 %v388, %v414
    %v427 = vadd.f32 %v389, %v414
    %v428 = vadd.f32 %v390, %v414
    %v429 = vadd.f32 %v391, %v414
    %v430 = vadd.f32 %v392, %v414
    %v431 = vadd.f32 %v393, %v414
    %v432 = vadd.f32 %v394, %v414
    %v433 = vadd.f32 %v395, %v414
    %v434 = vadd.f32 %v396, %v414
    %v435 = vadd.f32 %v397, %v414
    %v436 = vadd.f32 %v398, %v414
    %v437 = vadd.f32 %v399, %v414
    %v438 = vadd.f32 %v400, %v414
    %v439 = vadd.f32 %v401, %v414
    %v440 = vadd.f32 %v402, %v414
    %v441 = vadd.f32 %v403, %v414
    %v442 = vadd.f32 %v404, %v414
    %v443 = vadd.f32 %v405, %v414
    %v444 = vadd.f32 %v406, %v414
    %v445 = vadd.f32 %v407, %v414
    %v446 = vadd.f32 %v408, %v414
    %v447 = vadd.f32 %v409, %v414
    %v448 = vmax.f32 %v416, 0.0
    %v449 = vmax.f32 %v417, 0.0
    %v450 = vmax.f32 %v418, 0.0
    %v451 = vmax.f32 %v419, 0.0
    %v452 = vmax.f32 %v420, 0.0
    %v453 = vmax.f32 %v421, 0.0
    %v454 = vmax.f32 %v422, 0.0
    %v455 = vmax.f32 %v423, 0.0
    %v456 = vmax.f32 %v424, 0.0
    %v457 = vmax.f32 %v425, 0.0
    %v458 = vmax.f32 %v426, 0.0
    %v459 = vmax.f32 %v427, 0.0
    %v460 = vmax.f32 %v428, 0.0
    %v461 = vmax.f32 %v429, 0.0
    %v462 = vmax.f32 %v430, 0.0
    %v463 = vmax.f32 %v431, 0.0
    %v464 = vmax.f32 %v432, 0.0
    %v465 = vmax.f32 %v433, 0.0
    %v466 = vmax.f32 %v434, 0.0
    %v467 = vmax.f32 %v435, 0.0
    %v468 = vmax.f32 %v436, 0.0
    %v469 = vmax.f32 %v437, 0.0
    %v470 = vmax.f32 %v438, 0.0
    %v471 = vmax.f32 %v439, 0.0
    %v472 = vmax.f32 %v440, 0.0
    %v473 = vmax.f32 %v441, 0.0
    %v474 = vmax.f32 %v442, 0.0
    %v475 = vmax.f32 %v443, 0.0
    %v476 = vmax.f32 %v444, 0.0
    %v477 = vmax.f32 %v445, 0.0
    %v478 = vmax.f32 %v446, 0.0
    %v479 = vmax.f32 %v447, 0.0
    %v480 = vpack.c.bf16 %v449, %v448
    %v481 = vpack.c.bf16 %v451, %v450
    %v482 = vpack.c.bf16 %v453, %v452
    %v483 = vpack.c.bf16 %v455, %v454
    %v484 = vpack.c.bf16 %v457, %v456
    %v485 = vpack.c.bf16 %v459, %v458
    %v486 = vpack.c.bf16 %v461, %v460
    %v487 = vpack.c.bf16 %v463, %v462
    %v488 = vpack.c.bf16 %v465, %v464
    %v489 = vpack.c.bf16 %v467, %v466
    %v490 = vpack.c.bf16 %v469, %v468
    %v491 = vpack.c.bf16 %v471, %v470
    %v492 = vpack.c.bf16 %v473, %v472
    %v493 = vpack.c.bf16 %v475, %v474
    %v494 = vpack.c.bf16 %v477, %v476
    %v495 = vpack.c.bf16 %v479, %v478
    %v496 = vld [vmem:[%s5] sm:$0xf]
    %v497 = vld [vmem:[%s5 + $0x4] sm:$0xf]
    %v498 = vld [vmem:[%s6] sm:$0x1]
    %v499 = vld [vmem:[%s7] sm:$0x1]
    %v502 = vunpack.c.l.b16 %v496
    %v503 = vunpack.c.l.b16 %v497
    %v504 = vpack.c.b16 %v503, %v502
    %vm506 = vcmask 130048
    %v508 = vsel %vm506, %v480, 0
    %v511 = vsel %vm506, %v481, 0
    %v514 = vsel %vm506, %v482, 0
    %v517 = vsel %vm506, %v483, 0
    %v520 = vsel %vm506, %v484, 0
    %v523 = vsel %vm506, %v485, 0
    %v526 = vsel %vm506, %v486, 0
    %v529 = vsel %vm506, %v487, 0
    %v532 = vsel %vm506, %v488, 0
    %v535 = vsel %vm506, %v489, 0
    %v538 = vsel %vm506, %v490, 0
    %v541 = vsel %vm506, %v491, 0
    %v544 = vsel %vm506, %v492, 0
    %v547 = vsel %vm506, %v493, 0
    %v550 = vsel %vm506, %v494, 0
    %v553 = vsel %vm506, %v495, 0
    %555 = vmatprep.subr.bf16.mxu0 0
    %556 = vmatpush1.bf16.msra.mxu0 %v504
    %557 = vmatprep.subr.bf16.mxu0 0
    %558 = vmatpush1.bf16.msra.mxu0 0
    %559 = vmatprep.subr.bf16.mxu0 0
    %560 = vmatpush1.bf16.msra.mxu0 0
    %561 = vmatprep.subr.bf16.mxu0 0
    %562 = vmatpush1.bf16.msra.mxu0 0
    %563 = vmatprep.subr.bf16.mxu0 0
    %564 = vmatpush1.bf16.msra.mxu0 0
    %565 = vmatprep.subr.bf16.mxu0 0
    %566 = vmatpush1.bf16.msra.mxu0 0
    %567 = vmatprep.subr.bf16.mxu0 0
    %568 = vmatpush1.bf16.msra.mxu0 0
    %569 = vmatprep.subr.bf16.mxu0 0
    %570 = vmatpush1.bf16.msra.mxu0 0
    %571 = vmatprep.subr.bf16.mxu0 0
    %572 = vmatpush1.bf16.msra.mxu0 0
    %573 = vmatprep.subr.bf16.mxu0 0
    %574 = vmatpush1.bf16.msra.mxu0 0
    %575 = vmatprep.subr.bf16.mxu0 0
    %576 = vmatpush1.bf16.msra.mxu0 0
    %577 = vmatprep.subr.bf16.mxu0 0
    %578 = vmatpush1.bf16.msra.mxu0 0
    %579 = vmatprep.subr.bf16.mxu0 0
    %580 = vmatpush1.bf16.msra.mxu0 0
    %581 = vmatprep.subr.bf16.mxu0 0
    %582 = vmatpush1.bf16.msra.mxu0 0
    %583 = vmatprep.subr.bf16.mxu0 0
    %584 = vmatpush1.bf16.msra.mxu0 0
    %585 = vmatprep.subr.bf16.mxu0 0
    %586 = vmatpush1.bf16.msra.mxu0 0
    %587 = vmatprep.mubr.bf16.mxu0 0
    %588 = vmatmul.mubr.bf16.gmra.mrb[0].mxu0 %v508
    %v589 = vpop.f32.mrb[0].mxu0
    %v590 = vadd.f32 0.0, %v589
    %v591 = vpop.f32.mrb[0].mxu0
    %v592 = vpop.f32.mrb[0].mxu0
    %v593 = vadd.f32 0.0, %v592
    %v594 = vpop.f32.mrb[0].mxu0
    %595 = vmatprep.mubr.bf16.mxu0 0
    %596 = vmatmul.mubr.bf16.gmra.mrb[0].mxu0 %v511
    %v597 = vpop.f32.mrb[0].mxu0
    %v598 = vadd.f32 0.0, %v597
    %v599 = vpop.f32.mrb[0].mxu0
    %v600 = vpop.f32.mrb[0].mxu0
    %v601 = vadd.f32 0.0, %v600
    %v602 = vpop.f32.mrb[0].mxu0
    %603 = vmatprep.mubr.bf16.mxu0 0
    %604 = vmatmul.mubr.bf16.gmra.mrb[0].mxu0 %v514
    %v605 = vpop.f32.mrb[0].mxu0
    %v606 = vadd.f32 0.0, %v605
    %v607 = vpop.f32.mrb[0].mxu0
    %v608 = vpop.f32.mrb[0].mxu0
    %v609 = vadd.f32 0.0, %v608
    %v610 = vpop.f32.mrb[0].mxu0
    %611 = vmatprep.mubr.bf16.mxu0 0
    %612 = vmatmul.mubr.bf16.gmra.mrb[0].mxu0 %v517
    %v613 = vpop.f32.mrb[0].mxu0
    %v614 = vadd.f32 0.0, %v613
    %v615 = vpop.f32.mrb[0].mxu0
    %v616 = vpop.f32.mrb[0].mxu0
    %v617 = vadd.f32 0.0, %v616
    %v618 = vpop.f32.mrb[0].mxu0
    %619 = vmatprep.mubr.bf16.mxu0 0
    %620 = vmatmul.mubr.bf16.gmra.mrb[0].mxu0 %v520
    %v621 = vpop.f32.mrb[0].mxu0
    %v622 = vadd.f32 0.0, %v621
    %v623 = vpop.f32.mrb[0].mxu0
    %v624 = vpop.f32.mrb[0].mxu0
    %v625 = vadd.f32 0.0, %v624
    %v626 = vpop.f32.mrb[0].mxu0
    %627 = vmatprep.mubr.bf16.mxu0 0
    %628 = vmatmul.mubr.bf16.gmra.mrb[0].mxu0 %v523
    %v629 = vpop.f32.mrb[0].mxu0
    %v630 = vadd.f32 0.0, %v629
    %v631 = vpop.f32.mrb[0].mxu0
    %v632 = vpop.f32.mrb[0].mxu0
    %v633 = vadd.f32 0.0, %v632
    %v634 = vpop.f32.mrb[0].mxu0
    %635 = vmatprep.mubr.bf16.mxu0 0
    %636 = vmatmul.mubr.bf16.gmra.mrb[0].mxu0 %v526
    %v637 = vpop.f32.mrb[0].mxu0
    %v638 = vadd.f32 0.0, %v637
    %v639 = vpop.f32.mrb[0].mxu0
    %v640 = vpop.f32.mrb[0].mxu0
    %v641 = vadd.f32 0.0, %v640
    %v642 = vpop.f32.mrb[0].mxu0
    %643 = vmatprep.mubr.bf16.mxu0 0
    %644 = vmatmul.mubr.bf16.gmra.mrb[0].mxu0 %v529
    %v645 = vpop.f32.mrb[0].mxu0
    %v646 = vadd.f32 0.0, %v645
    %v647 = vpop.f32.mrb[0].mxu0
    %v648 = vpop.f32.mrb[0].mxu0
    %v649 = vadd.f32 0.0, %v648
    %v650 = vpop.f32.mrb[0].mxu0
    %651 = vmatprep.mubr.bf16.mxu0 0
    %652 = vmatmul.mubr.bf16.gmra.mrb[0].mxu0 %v532
    %v653 = vpop.f32.mrb[0].mxu0
    %v654 = vadd.f32 0.0, %v653
    %v655 = vpop.f32.mrb[0].mxu0
    %v656 = vpop.f32.mrb[0].mxu0
    %v657 = vadd.f32 0.0, %v656
    %v658 = vpop.f32.mrb[0].mxu0
    %659 = vmatprep.mubr.bf16.mxu0 0
    %660 = vmatmul.mubr.bf16.gmra.mrb[0].mxu0 %v535
    %v661 = vpop.f32.mrb[0].mxu0
    %v662 = vadd.f32 0.0, %v661
    %v663 = vpop.f32.mrb[0].mxu0
    %v664 = vpop.f32.mrb[0].mxu0
    %v665 = vadd.f32 0.0, %v664
    %v666 = vpop.f32.mrb[0].mxu0
    %667 = vmatprep.mubr.bf16.mxu0 0
    %668 = vmatmul.mubr.bf16.gmra.mrb[0].mxu0 %v538
    %v669 = vpop.f32.mrb[0].mxu0
    %v670 = vadd.f32 0.0, %v669
    %v671 = vpop.f32.mrb[0].mxu0
    %v672 = vpop.f32.mrb[0].mxu0
    %v673 = vadd.f32 0.0, %v672
    %v674 = vpop.f32.mrb[0].mxu0
    %675 = vmatprep.mubr.bf16.mxu0 0
    %676 = vmatmul.mubr.bf16.gmra.mrb[0].mxu0 %v541
    %v677 = vpop.f32.mrb[0].mxu0
    %v678 = vadd.f32 0.0, %v677
    %v679 = vpop.f32.mrb[0].mxu0
    %v680 = vpop.f32.mrb[0].mxu0
    %v681 = vadd.f32 0.0, %v680
    %v682 = vpop.f32.mrb[0].mxu0
    %683 = vmatprep.mubr.bf16.mxu0 0
    %684 = vmatmul.mubr.bf16.gmra.mrb[0].mxu0 %v544
    %v685 = vpop.f32.mrb[0].mxu0
    %v686 = vadd.f32 0.0, %v685
    %v687 = vpop.f32.mrb[0].mxu0
    %v688 = vpop.f32.mrb[0].mxu0
    %v689 = vadd.f32 0.0, %v688
    %v690 = vpop.f32.mrb[0].mxu0
    %691 = vmatprep.mubr.bf16.mxu0 0
    %692 = vmatmul.mubr.bf16.gmra.mrb[0].mxu0 %v547
    %v693 = vpop.f32.mrb[0].mxu0
    %v694 = vadd.f32 0.0, %v693
    %v695 = vpop.f32.mrb[0].mxu0
    %v696 = vpop.f32.mrb[0].mxu0
    %v697 = vadd.f32 0.0, %v696
    %v698 = vpop.f32.mrb[0].mxu0
    %699 = vmatprep.mubr.bf16.mxu0 0
    %700 = vmatmul.mubr.bf16.gmra.mrb[0].mxu0 %v550
    %v701 = vpop.f32.mrb[0].mxu0
    %v702 = vadd.f32 0.0, %v701
    %v703 = vpop.f32.mrb[0].mxu0
    %v704 = vpop.f32.mrb[0].mxu0
    %v705 = vadd.f32 0.0, %v704
    %v706 = vpop.f32.mrb[0].mxu0
    %707 = vmatprep.mubr.bf16.mxu0 0
    %708 = vmatmul.mubr.bf16.gmra.mrb[0].mxu0 %v553
    %v709 = vpop.f32.mrb[0].mxu0
    %v710 = vadd.f32 0.0, %v709
    %v711 = vpop.f32.mrb[0].mxu0
    %v712 = vpop.f32.mrb[0].mxu0
    %v713 = vadd.f32 0.0, %v712
    %v714 = vpop.f32.mrb[0].mxu0
    %715 = vdwg.mxu0
    %v717 = vlaneseq
    %v718 = vshrl.u32 %v717, 7
    %v719 = vsub.s32 0, %v718
    %v720 = vrot.slane %v498, %v719
    %v722 = vmul.f32 %v590, %v720
    %v723 = vmul.f32 %v593, %v720
    %v724 = vmul.f32 %v598, %v720
    %v725 = vmul.f32 %v601, %v720
    %v726 = vmul.f32 %v606, %v720
    %v727 = vmul.f32 %v609, %v720
    %v728 = vmul.f32 %v614, %v720
    %v729 = vmul.f32 %v617, %v720
    %v730 = vmul.f32 %v622, %v720
    %v731 = vmul.f32 %v625, %v720
    %v732 = vmul.f32 %v630, %v720
    %v733 = vmul.f32 %v633, %v720
    %v734 = vmul.f32 %v638, %v720
    %v735 = vmul.f32 %v641, %v720
    %v736 = vmul.f32 %v646, %v720
    %v737 = vmul.f32 %v649, %v720
    %v738 = vmul.f32 %v654, %v720
    %v739 = vmul.f32 %v657, %v720
    %v740 = vmul.f32 %v662, %v720
    %v741 = vmul.f32 %v665, %v720
    %v742 = vmul.f32 %v670, %v720
    %v743 = vmul.f32 %v673, %v720
    %v744 = vmul.f32 %v678, %v720
    %v745 = vmul.f32 %v681, %v720
    %v746 = vmul.f32 %v686, %v720
    %v747 = vmul.f32 %v689, %v720
    %v748 = vmul.f32 %v694, %v720
    %v749 = vmul.f32 %v697, %v720
    %v750 = vmul.f32 %v702, %v720
    %v751 = vmul.f32 %v705, %v720
    %v752 = vmul.f32 %v710, %v720
    %v753 = vmul.f32 %v713, %v720
    %v755 = vlaneseq
    %v756 = vshrl.u32 %v755, 7
    %v757 = vsub.s32 0, %v756
    %v758 = vrot.slane %v499, %v757
    %v760 = vadd.f32 %v722, %v758
    %v761 = vadd.f32 %v723, %v758
    %v762 = vadd.f32 %v724, %v758
    %v763 = vadd.f32 %v725, %v758
    %v764 = vadd.f32 %v726, %v758
    %v765 = vadd.f32 %v727, %v758
    %v766 = vadd.f32 %v728, %v758
    %v767 = vadd.f32 %v729, %v758
    %v768 = vadd.f32 %v730, %v758
    %v769 = vadd.f32 %v731, %v758
    %v770 = vadd.f32 %v732, %v758
    %v771 = vadd.f32 %v733, %v758
    %v772 = vadd.f32 %v734, %v758
    %v773 = vadd.f32 %v735, %v758
    %v774 = vadd.f32 %v736, %v758
    %v775 = vadd.f32 %v737, %v758
    %v776 = vadd.f32 %v738, %v758
    %v777 = vadd.f32 %v739, %v758
    %v778 = vadd.f32 %v740, %v758
    %v779 = vadd.f32 %v741, %v758
    %v780 = vadd.f32 %v742, %v758
    %v781 = vadd.f32 %v743, %v758
    %v782 = vadd.f32 %v744, %v758
    %v783 = vadd.f32 %v745, %v758
    %v784 = vadd.f32 %v746, %v758
    %v785 = vadd.f32 %v747, %v758
    %v786 = vadd.f32 %v748, %v758
    %v787 = vadd.f32 %v749, %v758
    %v788 = vadd.f32 %v750, %v758
    %v789 = vadd.f32 %v751, %v758
    %v790 = vadd.f32 %v752, %v758
    %v791 = vadd.f32 %v753, %v758
    %v792 = vmax.f32 %v760, 0.0
    %v793 = vmax.f32 %v761, 0.0
    %v794 = vmax.f32 %v762, 0.0
    %v795 = vmax.f32 %v763, 0.0
    %v796 = vmax.f32 %v764, 0.0
    %v797 = vmax.f32 %v765, 0.0
    %v798 = vmax.f32 %v766, 0.0
    %v799 = vmax.f32 %v767, 0.0
    %v800 = vmax.f32 %v768, 0.0
    %v801 = vmax.f32 %v769, 0.0
    %v802 = vmax.f32 %v770, 0.0
    %v803 = vmax.f32 %v771, 0.0
    %v804 = vmax.f32 %v772, 0.0
    %v805 = vmax.f32 %v773, 0.0
    %v806 = vmax.f32 %v774, 0.0
    %v807 = vmax.f32 %v775, 0.0
    %v808 = vmax.f32 %v776, 0.0
    %v809 = vmax.f32 %v777, 0.0
    %v810 = vmax.f32 %v778, 0.0
    %v811 = vmax.f32 %v779, 0.0
    %v812 = vmax.f32 %v780, 0.0
    %v813 = vmax.f32 %v781, 0.0
    %v814 = vmax.f32 %v782, 0.0
    %v815 = vmax.f32 %v783, 0.0
    %v816 = vmax.f32 %v784, 0.0
    %v817 = vmax.f32 %v785, 0.0
    %v818 = vmax.f32 %v786, 0.0
    %v819 = vmax.f32 %v787, 0.0
    %v820 = vmax.f32 %v788, 0.0
    %v821 = vmax.f32 %v789, 0.0
    %v822 = vmax.f32 %v790, 0.0
    %v823 = vmax.f32 %v791, 0.0
    %v824 = vld [vmem:[%s1] sm:$0xff]
    %v825 = vld [vmem:[%s1 + $0x8] sm:$0xff]
    %v826 = vld [vmem:[%s1 + $0x10] sm:$0xff]
    %v827 = vld [vmem:[%s1 + $0x18] sm:$0xff]
    %v828 = vlaneseq
    %v829 = vshrl.u32 %v828, 7
    %v830 = vsub.s32 0, %v829
    %v831 = vrot.slane %v824, %v830
    %833 = vbcast.lane.b32.xlu0 %v831, 256
    %v834 = vpop.permute.xlu0 %833
    %v835 = vlaneseq
    %v836 = vshrl.u32 %v835, 7
    %v837 = vsub.s32 1, %v836
    %v838 = vrot.slane %v824, %v837
    %840 = vbcast.lane.b32.xlu0 %v838, 256
    %v841 = vpop.permute.xlu0 %840
    %v842 = vlaneseq
    %v843 = vshrl.u32 %v842, 7
    %v844 = vsub.s32 2, %v843
    %v845 = vrot.slane %v824, %v844
    %847 = vbcast.lane.b32.xlu0 %v845, 256
    %v848 = vpop.permute.xlu0 %847
    %v849 = vlaneseq
    %v850 = vshrl.u32 %v849, 7
    %v851 = vsub.s32 3, %v850
    %v852 = vrot.slane %v824, %v851
    %854 = vbcast.lane.b32.xlu0 %v852, 256
    %v855 = vpop.permute.xlu0 %854
    %v856 = vlaneseq
    %v857 = vshrl.u32 %v856, 7
    %v858 = vsub.s32 4, %v857
    %v859 = vrot.slane %v824, %v858
    %861 = vbcast.lane.b32.xlu0 %v859, 256
    %v862 = vpop.permute.xlu0 %861
    %v863 = vlaneseq
    %v864 = vshrl.u32 %v863, 7
    %v865 = vsub.s32 5, %v864
    %v866 = vrot.slane %v824, %v865
    %868 = vbcast.lane.b32.xlu0 %v866, 256
    %v869 = vpop.permute.xlu0 %868
    %v870 = vlaneseq
    %v871 = vshrl.u32 %v870, 7
    %v872 = vsub.s32 6, %v871
    %v873 = vrot.slane %v824, %v872
    %875 = vbcast.lane.b32.xlu0 %v873, 256
    %v876 = vpop.permute.xlu0 %875
    %v877 = vlaneseq
    %v878 = vshrl.u32 %v877, 7
    %v879 = vsub.s32 7, %v878
    %v880 = vrot.slane %v824, %v879
    %882 = vbcast.lane.b32.xlu0 %v880, 256
    %v883 = vpop.permute.xlu0 %882
    %v884 = vlaneseq
    %v885 = vshrl.u32 %v884, 7
    %v886 = vsub.s32 0, %v885
    %v887 = vrot.slane %v825, %v886
    %889 = vbcast.lane.b32.xlu0 %v887, 256
    %v890 = vpop.permute.xlu0 %889
    %v891 = vlaneseq
    %v892 = vshrl.u32 %v891, 7
    %v893 = vsub.s32 1, %v892
    %v894 = vrot.slane %v825, %v893
    %896 = vbcast.lane.b32.xlu0 %v894, 256
    %v897 = vpop.permute.xlu0 %896
    %v898 = vlaneseq
    %v899 = vshrl.u32 %v898, 7
    %v900 = vsub.s32 2, %v899
    %v901 = vrot.slane %v825, %v900
    %903 = vbcast.lane.b32.xlu0 %v901, 256
    %v904 = vpop.permute.xlu0 %903
    %v905 = vlaneseq
    %v906 = vshrl.u32 %v905, 7
    %v907 = vsub.s32 3, %v906
    %v908 = vrot.slane %v825, %v907
    %910 = vbcast.lane.b32.xlu0 %v908, 256
    %v911 = vpop.permute.xlu0 %910
    %v912 = vlaneseq
    %v913 = vshrl.u32 %v912, 7
    %v914 = vsub.s32 4, %v913
    %v915 = vrot.slane %v825, %v914
    %917 = vbcast.lane.b32.xlu0 %v915, 256
    %v918 = vpop.permute.xlu0 %917
    %v919 = vlaneseq
    %v920 = vshrl.u32 %v919, 7
    %v921 = vsub.s32 5, %v920
    %v922 = vrot.slane %v825, %v921
    %924 = vbcast.lane.b32.xlu0 %v922, 256
    %v925 = vpop.permute.xlu0 %924
    %v926 = vlaneseq
    %v927 = vshrl.u32 %v926, 7
    %v928 = vsub.s32 6, %v927
    %v929 = vrot.slane %v825, %v928
    %931 = vbcast.lane.b32.xlu0 %v929, 256
    %v932 = vpop.permute.xlu0 %931
    %v933 = vlaneseq
    %v934 = vshrl.u32 %v933, 7
    %v935 = vsub.s32 7, %v934
    %v936 = vrot.slane %v825, %v935
    %938 = vbcast.lane.b32.xlu0 %v936, 256
    %v939 = vpop.permute.xlu0 %938
    %v940 = vlaneseq
    %v941 = vshrl.u32 %v940, 7
    %v942 = vsub.s32 0, %v941
    %v943 = vrot.slane %v826, %v942
    %945 = vbcast.lane.b32.xlu0 %v943, 256
    %v946 = vpop.permute.xlu0 %945
    %v947 = vlaneseq
    %v948 = vshrl.u32 %v947, 7
    %v949 = vsub.s32 1, %v948
    %v950 = vrot.slane %v826, %v949
    %952 = vbcast.lane.b32.xlu0 %v950, 256
    %v953 = vpop.permute.xlu0 %952
    %v954 = vlaneseq
    %v955 = vshrl.u32 %v954, 7
    %v956 = vsub.s32 2, %v955
    %v957 = vrot.slane %v826, %v956
    %959 = vbcast.lane.b32.xlu0 %v957, 256
    %v960 = vpop.permute.xlu0 %959
    %v961 = vlaneseq
    %v962 = vshrl.u32 %v961, 7
    %v963 = vsub.s32 3, %v962
    %v964 = vrot.slane %v826, %v963
    %966 = vbcast.lane.b32.xlu0 %v964, 256
    %v967 = vpop.permute.xlu0 %966
    %v968 = vlaneseq
    %v969 = vshrl.u32 %v968, 7
    %v970 = vsub.s32 4, %v969
    %v971 = vrot.slane %v826, %v970
    %973 = vbcast.lane.b32.xlu0 %v971, 256
    %v974 = vpop.permute.xlu0 %973
    %v975 = vlaneseq
    %v976 = vshrl.u32 %v975, 7
    %v977 = vsub.s32 5, %v976
    %v978 = vrot.slane %v826, %v977
    %980 = vbcast.lane.b32.xlu0 %v978, 256
    %v981 = vpop.permute.xlu0 %980
    %v982 = vlaneseq
    %v983 = vshrl.u32 %v982, 7
    %v984 = vsub.s32 6, %v983
    %v985 = vrot.slane %v826, %v984
    %987 = vbcast.lane.b32.xlu0 %v985, 256
    %v988 = vpop.permute.xlu0 %987
    %v989 = vlaneseq
    %v990 = vshrl.u32 %v989, 7
    %v991 = vsub.s32 7, %v990
    %v992 = vrot.slane %v826, %v991
    %994 = vbcast.lane.b32.xlu0 %v992, 256
    %v995 = vpop.permute.xlu0 %994
    %v996 = vlaneseq
    %v997 = vshrl.u32 %v996, 7
    %v998 = vsub.s32 0, %v997
    %v999 = vrot.slane %v827, %v998
    %1001 = vbcast.lane.b32.xlu0 %v999, 256
    %v1002 = vpop.permute.xlu0 %1001
    %v1003 = vlaneseq
    %v1004 = vshrl.u32 %v1003, 7
    %v1005 = vsub.s32 1, %v1004
    %v1006 = vrot.slane %v827, %v1005
    %1008 = vbcast.lane.b32.xlu0 %v1006, 256
    %v1009 = vpop.permute.xlu0 %1008
    %v1010 = vlaneseq
    %v1011 = vshrl.u32 %v1010, 7
    %v1012 = vsub.s32 2, %v1011
    %v1013 = vrot.slane %v827, %v1012
    %1015 = vbcast.lane.b32.xlu0 %v1013, 256
    %v1016 = vpop.permute.xlu0 %1015
    %v1017 = vlaneseq
    %v1018 = vshrl.u32 %v1017, 7
    %v1019 = vsub.s32 3, %v1018
    %v1020 = vrot.slane %v827, %v1019
    %1022 = vbcast.lane.b32.xlu0 %v1020, 256
    %v1023 = vpop.permute.xlu0 %1022
    %v1024 = vlaneseq
    %v1025 = vshrl.u32 %v1024, 7
    %v1026 = vsub.s32 4, %v1025
    %v1027 = vrot.slane %v827, %v1026
    %1029 = vbcast.lane.b32.xlu0 %v1027, 256
    %v1030 = vpop.permute.xlu0 %1029
    %v1031 = vlaneseq
    %v1032 = vshrl.u32 %v1031, 7
    %v1033 = vsub.s32 5, %v1032
    %v1034 = vrot.slane %v827, %v1033
    %1036 = vbcast.lane.b32.xlu0 %v1034, 256
    %v1037 = vpop.permute.xlu0 %1036
    %v1038 = vlaneseq
    %v1039 = vshrl.u32 %v1038, 7
    %v1040 = vsub.s32 6, %v1039
    %v1041 = vrot.slane %v827, %v1040
    %1043 = vbcast.lane.b32.xlu0 %v1041, 256
    %v1044 = vpop.permute.xlu0 %1043
    %v1045 = vlaneseq
    %v1046 = vshrl.u32 %v1045, 7
    %v1047 = vsub.s32 7, %v1046
    %v1048 = vrot.slane %v827, %v1047
    %1050 = vbcast.lane.b32.xlu0 %v1048, 256
    %v1051 = vpop.permute.xlu0 %1050
    %v1052 = vadd.f32 %v792, %v834
    %v1053 = vadd.f32 %v793, %v841
    %v1054 = vadd.f32 %v794, %v848
    %v1055 = vadd.f32 %v795, %v855
    %v1056 = vadd.f32 %v796, %v862
    %v1057 = vadd.f32 %v797, %v869
    %v1058 = vadd.f32 %v798, %v876
    %v1059 = vadd.f32 %v799, %v883
    %v1060 = vadd.f32 %v800, %v890
    %v1061 = vadd.f32 %v801, %v897
    %v1062 = vadd.f32 %v802, %v904
    %v1063 = vadd.f32 %v803, %v911
    %v1064 = vadd.f32 %v804, %v918
    %v1065 = vadd.f32 %v805, %v925
    %v1066 = vadd.f32 %v806, %v932
    %v1067 = vadd.f32 %v807, %v939
    %v1068 = vadd.f32 %v808, %v946
    %v1069 = vadd.f32 %v809, %v953
    %v1070 = vadd.f32 %v810, %v960
    %v1071 = vadd.f32 %v811, %v967
    %v1072 = vadd.f32 %v812, %v974
    %v1073 = vadd.f32 %v813, %v981
    %v1074 = vadd.f32 %v814, %v988
    %v1075 = vadd.f32 %v815, %v995
    %v1076 = vadd.f32 %v816, %v1002
    %v1077 = vadd.f32 %v817, %v1009
    %v1078 = vadd.f32 %v818, %v1016
    %v1079 = vadd.f32 %v819, %v1023
    %v1080 = vadd.f32 %v820, %v1030
    %v1081 = vadd.f32 %v821, %v1037
    %v1082 = vadd.f32 %v822, %v1044
    %v1083 = vadd.f32 %v823, %v1051
    %vm1084 = vcmask 261120
    %v1085 = vsel %vm1084, %v1052, -inf
    %v1086 = vrot.slane %v1085, 4
    %v1087 = vmax.f32 %v1085, %v1086
    %v1088 = vrot.slane %v1087, 2
    %v1089 = vmax.f32 %v1087, %v1088
    %v1090 = vrot.slane %v1089, 1
    %v1091 = vmax.f32 %v1089, %v1090
    %v1092 = vsel %vm1084, %v1053, -inf
    %v1093 = vrot.slane %v1092, 4
    %v1094 = vmax.f32 %v1092, %v1093
    %v1095 = vrot.slane %v1094, 2
    %v1096 = vmax.f32 %v1094, %v1095
    %v1097 = vrot.slane %v1096, 1
    %v1098 = vmax.f32 %v1096, %v1097
    %v1099 = vsel %vm1084, %v1054, -inf
    %v1100 = vrot.slane %v1099, 4
    %v1101 = vmax.f32 %v1099, %v1100
    %v1102 = vrot.slane %v1101, 2
    %v1103 = vmax.f32 %v1101, %v1102
    %v1104 = vrot.slane %v1103, 1
    %v1105 = vmax.f32 %v1103, %v1104
    %v1106 = vsel %vm1084, %v1055, -inf
    %v1107 = vrot.slane %v1106, 4
    %v1108 = vmax.f32 %v1106, %v1107
    %v1109 = vrot.slane %v1108, 2
    %v1110 = vmax.f32 %v1108, %v1109
    %v1111 = vrot.slane %v1110, 1
    %v1112 = vmax.f32 %v1110, %v1111
    %v1113 = vsel %vm1084, %v1056, -inf
    %v1114 = vrot.slane %v1113, 4
    %v1115 = vmax.f32 %v1113, %v1114
    %v1116 = vrot.slane %v1115, 2
    %v1117 = vmax.f32 %v1115, %v1116
    %v1118 = vrot.slane %v1117, 1
    %v1119 = vmax.f32 %v1117, %v1118
    %v1120 = vsel %vm1084, %v1057, -inf
    %v1121 = vrot.slane %v1120, 4
    %v1122 = vmax.f32 %v1120, %v1121
    %v1123 = vrot.slane %v1122, 2
    %v1124 = vmax.f32 %v1122, %v1123
    %v1125 = vrot.slane %v1124, 1
    %v1126 = vmax.f32 %v1124, %v1125
    %v1127 = vsel %vm1084, %v1058, -inf
    %v1128 = vrot.slane %v1127, 4
    %v1129 = vmax.f32 %v1127, %v1128
    %v1130 = vrot.slane %v1129, 2
    %v1131 = vmax.f32 %v1129, %v1130
    %v1132 = vrot.slane %v1131, 1
    %v1133 = vmax.f32 %v1131, %v1132
    %v1134 = vsel %vm1084, %v1059, -inf
    %v1135 = vrot.slane %v1134, 4
    %v1136 = vmax.f32 %v1134, %v1135
    %v1137 = vrot.slane %v1136, 2
    %v1138 = vmax.f32 %v1136, %v1137
    %v1139 = vrot.slane %v1138, 1
    %v1140 = vmax.f32 %v1138, %v1139
    %v1141 = vsel %vm1084, %v1060, -inf
    %v1142 = vrot.slane %v1141, 4
    %v1143 = vmax.f32 %v1141, %v1142
    %v1144 = vrot.slane %v1143, 2
    %v1145 = vmax.f32 %v1143, %v1144
    %v1146 = vrot.slane %v1145, 1
    %v1147 = vmax.f32 %v1145, %v1146
    %v1148 = vsel %vm1084, %v1061, -inf
    %v1149 = vrot.slane %v1148, 4
    %v1150 = vmax.f32 %v1148, %v1149
    %v1151 = vrot.slane %v1150, 2
    %v1152 = vmax.f32 %v1150, %v1151
    %v1153 = vrot.slane %v1152, 1
    %v1154 = vmax.f32 %v1152, %v1153
    %v1155 = vsel %vm1084, %v1062, -inf
    %v1156 = vrot.slane %v1155, 4
    %v1157 = vmax.f32 %v1155, %v1156
    %v1158 = vrot.slane %v1157, 2
    %v1159 = vmax.f32 %v1157, %v1158
    %v1160 = vrot.slane %v1159, 1
    %v1161 = vmax.f32 %v1159, %v1160
    %v1162 = vsel %vm1084, %v1063, -inf
    %v1163 = vrot.slane %v1162, 4
    %v1164 = vmax.f32 %v1162, %v1163
    %v1165 = vrot.slane %v1164, 2
    %v1166 = vmax.f32 %v1164, %v1165
    %v1167 = vrot.slane %v1166, 1
    %v1168 = vmax.f32 %v1166, %v1167
    %v1169 = vsel %vm1084, %v1064, -inf
    %v1170 = vrot.slane %v1169, 4
    %v1171 = vmax.f32 %v1169, %v1170
    %v1172 = vrot.slane %v1171, 2
    %v1173 = vmax.f32 %v1171, %v1172
    %v1174 = vrot.slane %v1173, 1
    %v1175 = vmax.f32 %v1173, %v1174
    %v1176 = vsel %vm1084, %v1065, -inf
    %v1177 = vrot.slane %v1176, 4
    %v1178 = vmax.f32 %v1176, %v1177
    %v1179 = vrot.slane %v1178, 2
    %v1180 = vmax.f32 %v1178, %v1179
    %v1181 = vrot.slane %v1180, 1
    %v1182 = vmax.f32 %v1180, %v1181
    %v1183 = vsel %vm1084, %v1066, -inf
    %v1184 = vrot.slane %v1183, 4
    %v1185 = vmax.f32 %v1183, %v1184
    %v1186 = vrot.slane %v1185, 2
    %v1187 = vmax.f32 %v1185, %v1186
    %v1188 = vrot.slane %v1187, 1
    %v1189 = vmax.f32 %v1187, %v1188
    %v1190 = vsel %vm1084, %v1067, -inf
    %v1191 = vrot.slane %v1190, 4
    %v1192 = vmax.f32 %v1190, %v1191
    %v1193 = vrot.slane %v1192, 2
    %v1194 = vmax.f32 %v1192, %v1193
    %v1195 = vrot.slane %v1194, 1
    %v1196 = vmax.f32 %v1194, %v1195
    %v1197 = vsel %vm1084, %v1068, -inf
    %v1198 = vrot.slane %v1197, 4
    %v1199 = vmax.f32 %v1197, %v1198
    %v1200 = vrot.slane %v1199, 2
    %v1201 = vmax.f32 %v1199, %v1200
    %v1202 = vrot.slane %v1201, 1
    %v1203 = vmax.f32 %v1201, %v1202
    %v1204 = vsel %vm1084, %v1069, -inf
    %v1205 = vrot.slane %v1204, 4
    %v1206 = vmax.f32 %v1204, %v1205
    %v1207 = vrot.slane %v1206, 2
    %v1208 = vmax.f32 %v1206, %v1207
    %v1209 = vrot.slane %v1208, 1
    %v1210 = vmax.f32 %v1208, %v1209
    %v1211 = vsel %vm1084, %v1070, -inf
    %v1212 = vrot.slane %v1211, 4
    %v1213 = vmax.f32 %v1211, %v1212
    %v1214 = vrot.slane %v1213, 2
    %v1215 = vmax.f32 %v1213, %v1214
    %v1216 = vrot.slane %v1215, 1
    %v1217 = vmax.f32 %v1215, %v1216
    %v1218 = vsel %vm1084, %v1071, -inf
    %v1219 = vrot.slane %v1218, 4
    %v1220 = vmax.f32 %v1218, %v1219
    %v1221 = vrot.slane %v1220, 2
    %v1222 = vmax.f32 %v1220, %v1221
    %v1223 = vrot.slane %v1222, 1
    %v1224 = vmax.f32 %v1222, %v1223
    %v1225 = vsel %vm1084, %v1072, -inf
    %v1226 = vrot.slane %v1225, 4
    %v1227 = vmax.f32 %v1225, %v1226
    %v1228 = vrot.slane %v1227, 2
    %v1229 = vmax.f32 %v1227, %v1228
    %v1230 = vrot.slane %v1229, 1
    %v1231 = vmax.f32 %v1229, %v1230
    %v1232 = vsel %vm1084, %v1073, -inf
    %v1233 = vrot.slane %v1232, 4
    %v1234 = vmax.f32 %v1232, %v1233
    %v1235 = vrot.slane %v1234, 2
    %v1236 = vmax.f32 %v1234, %v1235
    %v1237 = vrot.slane %v1236, 1
    %v1238 = vmax.f32 %v1236, %v1237
    %v1239 = vsel %vm1084, %v1074, -inf
    %v1240 = vrot.slane %v1239, 4
    %v1241 = vmax.f32 %v1239, %v1240
    %v1242 = vrot.slane %v1241, 2
    %v1243 = vmax.f32 %v1241, %v1242
    %v1244 = vrot.slane %v1243, 1
    %v1245 = vmax.f32 %v1243, %v1244
    %v1246 = vsel %vm1084, %v1075, -inf
    %v1247 = vrot.slane %v1246, 4
    %v1248 = vmax.f32 %v1246, %v1247
    %v1249 = vrot.slane %v1248, 2
    %v1250 = vmax.f32 %v1248, %v1249
    %v1251 = vrot.slane %v1250, 1
    %v1252 = vmax.f32 %v1250, %v1251
    %v1253 = vsel %vm1084, %v1076, -inf
    %v1254 = vrot.slane %v1253, 4
    %v1255 = vmax.f32 %v1253, %v1254
    %v1256 = vrot.slane %v1255, 2
    %v1257 = vmax.f32 %v1255, %v1256
    %v1258 = vrot.slane %v1257, 1
    %v1259 = vmax.f32 %v1257, %v1258
    %v1260 = vsel %vm1084, %v1077, -inf
    %v1261 = vrot.slane %v1260, 4
    %v1262 = vmax.f32 %v1260, %v1261
    %v1263 = vrot.slane %v1262, 2
    %v1264 = vmax.f32 %v1262, %v1263
    %v1265 = vrot.slane %v1264, 1
    %v1266 = vmax.f32 %v1264, %v1265
    %v1267 = vsel %vm1084, %v1078, -inf
    %v1268 = vrot.slane %v1267, 4
    %v1269 = vmax.f32 %v1267, %v1268
    %v1270 = vrot.slane %v1269, 2
    %v1271 = vmax.f32 %v1269, %v1270
    %v1272 = vrot.slane %v1271, 1
    %v1273 = vmax.f32 %v1271, %v1272
    %v1274 = vsel %vm1084, %v1079, -inf
    %v1275 = vrot.slane %v1274, 4
    %v1276 = vmax.f32 %v1274, %v1275
    %v1277 = vrot.slane %v1276, 2
    %v1278 = vmax.f32 %v1276, %v1277
    %v1279 = vrot.slane %v1278, 1
    %v1280 = vmax.f32 %v1278, %v1279
    %v1281 = vsel %vm1084, %v1080, -inf
    %v1282 = vrot.slane %v1281, 4
    %v1283 = vmax.f32 %v1281, %v1282
    %v1284 = vrot.slane %v1283, 2
    %v1285 = vmax.f32 %v1283, %v1284
    %v1286 = vrot.slane %v1285, 1
    %v1287 = vmax.f32 %v1285, %v1286
    %v1288 = vsel %vm1084, %v1081, -inf
    %v1289 = vrot.slane %v1288, 4
    %v1290 = vmax.f32 %v1288, %v1289
    %v1291 = vrot.slane %v1290, 2
    %v1292 = vmax.f32 %v1290, %v1291
    %v1293 = vrot.slane %v1292, 1
    %v1294 = vmax.f32 %v1292, %v1293
    %v1295 = vsel %vm1084, %v1082, -inf
    %v1296 = vrot.slane %v1295, 4
    %v1297 = vmax.f32 %v1295, %v1296
    %v1298 = vrot.slane %v1297, 2
    %v1299 = vmax.f32 %v1297, %v1298
    %v1300 = vrot.slane %v1299, 1
    %v1301 = vmax.f32 %v1299, %v1300
    %v1302 = vsel %vm1084, %v1083, -inf
    %v1303 = vrot.slane %v1302, 4
    %v1304 = vmax.f32 %v1302, %v1303
    %v1305 = vrot.slane %v1304, 2
    %v1306 = vmax.f32 %v1304, %v1305
    %v1307 = vrot.slane %v1306, 1
    %v1308 = vmax.f32 %v1306, %v1307
    %v1309 = vpack.c.bf16 %v1091, %v1091
    %v1310 = vpack.c.bf16 %v1098, %v1098
    %v1311 = vpack.c.bf16 %v1105, %v1105
    %v1312 = vpack.c.bf16 %v1112, %v1112
    %v1313 = vpack.c.bf16 %v1119, %v1119
    %v1314 = vpack.c.bf16 %v1126, %v1126
    %v1315 = vpack.c.bf16 %v1133, %v1133
    %v1316 = vpack.c.bf16 %v1140, %v1140
    %v1317 = vpack.c.bf16 %v1147, %v1147
    %v1318 = vpack.c.bf16 %v1154, %v1154
    %v1319 = vpack.c.bf16 %v1161, %v1161
    %v1320 = vpack.c.bf16 %v1168, %v1168
    %v1321 = vpack.c.bf16 %v1175, %v1175
    %v1322 = vpack.c.bf16 %v1182, %v1182
    %v1323 = vpack.c.bf16 %v1189, %v1189
    %v1324 = vpack.c.bf16 %v1196, %v1196
    %v1325 = vpack.c.bf16 %v1203, %v1203
    %v1326 = vpack.c.bf16 %v1210, %v1210
    %v1327 = vpack.c.bf16 %v1217, %v1217
    %v1328 = vpack.c.bf16 %v1224, %v1224
    %v1329 = vpack.c.bf16 %v1231, %v1231
    %v1330 = vpack.c.bf16 %v1238, %v1238
    %v1331 = vpack.c.bf16 %v1245, %v1245
    %v1332 = vpack.c.bf16 %v1252, %v1252
    %v1333 = vpack.c.bf16 %v1259, %v1259
    %v1334 = vpack.c.bf16 %v1266, %v1266
    %v1335 = vpack.c.bf16 %v1273, %v1273
    %v1336 = vpack.c.bf16 %v1280, %v1280
    %v1337 = vpack.c.bf16 %v1287, %v1287
    %v1338 = vpack.c.bf16 %v1294, %v1294
    %v1339 = vpack.c.bf16 %v1301, %v1301
    %v1340 = vpack.c.bf16 %v1308, %v1308
    %v1341 = vld [vmem:[%s8] sm:$0xf]
    %v1342 = vld [vmem:[%s8 + $0x4] sm:$0xf]
    %v1343 = vld [vmem:[%s8 + $0x8] sm:$0xf]
    %v1344 = vld [vmem:[%s8 + $0xc] sm:$0xf]
    %v1345 = vld [vmem:[%s9] sm:$0x1]
    %v1346 = vld [vmem:[%s10] sm:$0x1]
    %v1379 = vunpack.c.l.b16 %v1309
    %v1380 = vunpack.c.l.b16 %v1310
    %v1381 = vunpack.c.l.b16 %v1311
    %v1382 = vunpack.c.l.b16 %v1312
    %v1383 = vunpack.c.l.b16 %v1313
    %v1384 = vunpack.c.l.b16 %v1314
    %v1385 = vunpack.c.l.b16 %v1315
    %v1386 = vunpack.c.l.b16 %v1316
    %v1387 = vunpack.c.l.b16 %v1317
    %v1388 = vunpack.c.l.b16 %v1318
    %v1389 = vunpack.c.l.b16 %v1319
    %v1390 = vunpack.c.l.b16 %v1320
    %v1391 = vunpack.c.l.b16 %v1321
    %v1392 = vunpack.c.l.b16 %v1322
    %v1393 = vunpack.c.l.b16 %v1323
    %v1394 = vunpack.c.l.b16 %v1324
    %v1395 = vunpack.c.l.b16 %v1325
    %v1396 = vunpack.c.l.b16 %v1326
    %v1397 = vunpack.c.l.b16 %v1327
    %v1398 = vunpack.c.l.b16 %v1328
    %v1399 = vunpack.c.l.b16 %v1329
    %v1400 = vunpack.c.l.b16 %v1330
    %v1401 = vunpack.c.l.b16 %v1331
    %v1402 = vunpack.c.l.b16 %v1332
    %v1403 = vunpack.c.l.b16 %v1333
    %v1404 = vunpack.c.l.b16 %v1334
    %v1405 = vunpack.c.l.b16 %v1335
    %v1406 = vunpack.c.l.b16 %v1336
    %v1407 = vunpack.c.l.b16 %v1337
    %v1408 = vunpack.c.l.b16 %v1338
    %v1409 = vunpack.c.l.b16 %v1339
    %v1410 = vunpack.c.l.b16 %v1340
    %vm1411 = vcmask 1041409
    %v1412 = vsel %vm1411, %v1380, %v1379
    %vm1413 = vcmask 1042434
    %v1414 = vsel %vm1413, %v1381, %v1412
    %vm1415 = vcmask 1043459
    %v1416 = vsel %vm1415, %v1382, %v1414
    %vm1417 = vcmask 1044484
    %v1418 = vsel %vm1417, %v1383, %v1416
    %vm1419 = vcmask 1045509
    %v1420 = vsel %vm1419, %v1384, %v1418
    %vm1421 = vcmask 1046534
    %v1422 = vsel %vm1421, %v1385, %v1420
    %vm1423 = vcmask 1047559
    %v1424 = vsel %vm1423, %v1386, %v1422
    %v1425 = vsel %vm1411, %v1388, %v1387
    %v1426 = vsel %vm1413, %v1389, %v1425
    %v1427 = vsel %vm1415, %v1390, %v1426
    %v1428 = vsel %vm1417, %v1391, %v1427
    %v1429 = vsel %vm1419, %v1392, %v1428
    %v1430 = vsel %vm1421, %v1393, %v1429
    %v1431 = vsel %vm1423, %v1394, %v1430
    %v1432 = vsel %vm1411, %v1396, %v1395
    %v1433 = vsel %vm1413, %v1397, %v1432
    %v1434 = vsel %vm1415, %v1398, %v1433
    %v1435 = vsel %vm1417, %v1399, %v1434
    %v1436 = vsel %vm1419, %v1400, %v1435
    %v1437 = vsel %vm1421, %v1401, %v1436
    %v1438 = vsel %vm1423, %v1402, %v1437
    %v1439 = vsel %vm1411, %v1404, %v1403
    %v1440 = vsel %vm1413, %v1405, %v1439
    %v1441 = vsel %vm1415, %v1406, %v1440
    %v1442 = vsel %vm1417, %v1407, %v1441
    %v1443 = vsel %vm1419, %v1408, %v1442
    %v1444 = vsel %vm1421, %v1409, %v1443
    %v1445 = vsel %vm1423, %v1410, %v1444
    %v1446 = vpack.c.b16 %v1431, %v1424
    %v1447 = vpack.c.b16 %v1445, %v1438
    %v1452 = vunpack.c.l.b16 %v1341
    %v1453 = vunpack.c.l.b16 %v1342
    %v1454 = vunpack.c.l.b16 %v1343
    %v1455 = vunpack.c.l.b16 %v1344
    %v1456 = vpack.c.b16 %v1453, %v1452
    %v1457 = vpack.c.b16 %v1455, %v1454
    %v1461 = vsel %vm1084, %v1446, 0
    %v1464 = vsel %vm1084, %v1447, 0
    %1466 = vmatprep.subr.bf16.mxu0 0
    %1467 = vmatpush1.bf16.msra.mxu0 %v1456
    %1468 = vmatprep.subr.bf16.mxu0 0
    %1469 = vmatpush1.bf16.msra.mxu0 %v1457
    %1470 = vmatprep.subr.bf16.mxu0 0
    %1471 = vmatpush1.bf16.msra.mxu0 0
    %1472 = vmatprep.subr.bf16.mxu0 0
    %1473 = vmatpush1.bf16.msra.mxu0 0
    %1474 = vmatprep.subr.bf16.mxu0 0
    %1475 = vmatpush1.bf16.msra.mxu0 0
    %1476 = vmatprep.subr.bf16.mxu0 0
    %1477 = vmatpush1.bf16.msra.mxu0 0
    %1478 = vmatprep.subr.bf16.mxu0 0
    %1479 = vmatpush1.bf16.msra.mxu0 0
    %1480 = vmatprep.subr.bf16.mxu0 0
    %1481 = vmatpush1.bf16.msra.mxu0 0
    %1482 = vmatprep.subr.bf16.mxu0 0
    %1483 = vmatpush1.bf16.msra.mxu0 0
    %1484 = vmatprep.subr.bf16.mxu0 0
    %1485 = vmatpush1.bf16.msra.mxu0 0
    %1486 = vmatprep.subr.bf16.mxu0 0
    %1487 = vmatpush1.bf16.msra.mxu0 0
    %1488 = vmatprep.subr.bf16.mxu0 0
    %1489 = vmatpush1.bf16.msra.mxu0 0
    %1490 = vmatprep.subr.bf16.mxu0 0
    %1491 = vmatpush1.bf16.msra.mxu0 0
    %1492 = vmatprep.subr.bf16.mxu0 0
    %1493 = vmatpush1.bf16.msra.mxu0 0
    %1494 = vmatprep.subr.bf16.mxu0 0
    %1495 = vmatpush1.bf16.msra.mxu0 0
    %1496 = vmatprep.subr.bf16.mxu0 0
    %1497 = vmatpush1.bf16.msra.mxu0 0
    %1498 = vmatprep.mubr.bf16.mxu0 0
    %1499 = vmatmul.mubr.bf16.gmra.mrb[0].mxu0 %v1461
    %v1500 = vpop.f32.mrb[0].mxu0
    %v1501 = vadd.f32 0.0, %v1500
    %v1502 = vpop.f32.mrb[0].mxu0
    %v1503 = vpop.f32.mrb[0].mxu0
    %v1504 = vadd.f32 0.0, %v1503
    %v1505 = vpop.f32.mrb[0].mxu0
    %1506 = vmatprep.mubr.bf16.mxu0 0
    %1507 = vmatmul.mubr.bf16.gmra.mrb[0].mxu0 %v1464
    %v1508 = vpop.f32.mrb[0].mxu0
    %v1509 = vadd.f32 0.0, %v1508
    %v1510 = vpop.f32.mrb[0].mxu0
    %v1511 = vpop.f32.mrb[0].mxu0
    %v1512 = vadd.f32 0.0, %v1511
    %v1513 = vpop.f32.mrb[0].mxu0
    %1514 = vdwg.mxu0
    %v1516 = vlaneseq
    %v1517 = vshrl.u32 %v1516, 7
    %v1518 = vsub.s32 0, %v1517
    %v1519 = vrot.slane %v1345, %v1518
    %v1521 = vmul.f32 %v1501, %v1519
    %v1522 = vmul.f32 %v1504, %v1519
    %v1523 = vmul.f32 %v1509, %v1519
    %v1524 = vmul.f32 %v1512, %v1519
    %v1526 = vlaneseq
    %v1527 = vshrl.u32 %v1526, 7
    %v1528 = vsub.s32 0, %v1527
    %v1529 = vrot.slane %v1346, %v1528
    %v1531 = vadd.f32 %v1521, %v1529
    %v1532 = vadd.f32 %v1522, %v1529
    %v1533 = vadd.f32 %v1523, %v1529
    %v1534 = vadd.f32 %v1524, %v1529
    %v1535 = vmax.f32 %v1531, 0.0
    %v1536 = vmax.f32 %v1532, 0.0
    %v1537 = vmax.f32 %v1533, 0.0
    %v1538 = vmax.f32 %v1534, 0.0
    %1539 = vst [vmem:[#allocation2] sm:$0xff] %v1535
    %1540 = vst [vmem:[#allocation2 + $0x8] sm:$0xff] %v1536
    %1541 = vst [vmem:[#allocation2 + $0x10] sm:$0xff] %v1537
    %1542 = vst [vmem:[#allocation2 + $0x18] sm:$0xff] %v1538
    // Predicated region
    $region46: #{a_call__.1} parent=1 // pred_check
      _
    $region47: #{a_call__.1} parent=1 // pred_check_branch
      %1544 = sbr.rel (0) target = $region49
    $region48: #{a_call__.1} parent=1 // pred_region
      %s1546 = ssub.s32 512, 512
      %1547 = vsyncadd [#allocation3], %s1546
      %s1548 = sshll.u32 [#allocation2], 4
      %s1549 = int_to_ptr.vmem [resolvable:$true] %s1548
      %1554 = dma.vmem_to_hbm [thread:$0]  %s1549, 512, %s11, [#allocation3], 128, 128, 8
    $region49: #{a_call__.1} parent=1 // pred_fallthru
      _
    // Predicated region
    $region50: #{a_call__.1} parent=1 // pred_check
      _
    $region51: #{a_call__.1} parent=1 // pred_check_branch
      %1556 = sbr.rel (0) target = $region53
    $region52: #{a_call__.1} parent=1 // pred_region
      %1557 = dma.done [#allocation3], 512
    $region53: #{a_call__.1} parent=1 // pred_fallthru
      _
    %1558 = vsyncpa [#allocation3], 1

</llo_original>
